<compile_context>
chip_gen: v7x
topology: tpu7x:2x2x1
jax: 0.10.0
libtpu: 0.0.40
codegen_flags: <defaults>
</compile_context>

<pallas_src>
import functools
import math

import jax
import jax.numpy as jnp
import numpy as np
from jax.experimental import pallas as pl
from jax.experimental.pallas import tpu as pltpu

_MASK_VALUE = -1e30                      # Python float -> literal, never captured
_VMEM_LIMIT = 32 * 1024 * 1024           # safe on v5e/v6e (128 MiB) and v7x (64 MiB)


def _pick_tile(dim, target, align):
    """Largest tile <= target that divides dim and is a multiple of `align`,
    falling back to the full dim (always a legal Pallas block)."""
    if dim <= target:
        return dim
    t = min(target, dim)
    t -= t % align
    while t >= align:
        if dim % t == 0:
            return t
        t -= align
    return dim


def _pick_head_block(num_heads, head_dim, target=512):
    """Largest divisor of num_heads with hb*head_dim <= target lanes of output."""
    best = 1
    for hb in range(1, num_heads + 1):
        if num_heads % hb == 0 and hb * head_dim <= target:
            best = hb
    return best


# --------------------------------------------------------------------------
# Kernel 1: fused Q/K/V projection + head split (multi-head blocked matmul)
#   x: [B, S, hidden]; wq/wk/wv: [H, Dh, hidden]; outputs: [B, H, S, Dh]
#   grid = (B, H//Hblk, S//Ts, hidden//Tk)   (last axis = contraction)
# --------------------------------------------------------------------------
def _qkv_proj_kernel(x_ref, wq_ref, wk_ref, wv_ref,
                     q_ref, k_ref, v_ref,
                     q_acc, k_acc, v_acc, *, scale, heads_per_block):
    ki = pl.program_id(3)
    nk = pl.num_programs(3)

    @pl.when(ki == 0)
    def _():
        q_acc[...] = jnp.zeros_like(q_acc)
        k_acc[...] = jnp.zeros_like(k_acc)
        v_acc[...] = jnp.zeros_like(v_acc)

    x = x_ref[0]                        # (Ts, Tk)
    dims = (((1,), (1,)), ((), ()))     # x @ w^T : contract the hidden chunk
    for h in range(heads_per_block):
        q_acc[h] += jax.lax.dot_general(x, wq_ref[h], dims,
                                        preferred_element_type=jnp.float32)
        k_acc[h] += jax.lax.dot_general(x, wk_ref[h], dims,
                                        preferred_element_type=jnp.float32)
        v_acc[h] += jax.lax.dot_general(x, wv_ref[h], dims,
                                        preferred_element_type=jnp.float32)

    @pl.when(ki == nk - 1)
    def _():
        # Fold the softmax scale into q once (cheaper than scaling scores).
        q_ref[0] = (q_acc[...] * scale).astype(q_ref.dtype)
        k_ref[0] = k_acc[...].astype(k_ref.dtype)
        v_ref[0] = v_acc[...].astype(v_ref.dtype)


# --------------------------------------------------------------------------
# Kernel 2: MoBA attention (flash-style; all variants folded into the body)
#   grid = (B, H, nq, nk); q/k/v/o: [B, H, S, Dh]
# --------------------------------------------------------------------------
def _moba_attn_kernel(q_ref, k_ref, v_ref, o_ref,
                      m_sc, l_sc, acc_sc, *,
                      bs_list, kmax_tile_list, num_kv_tiles, seq_len, tile):
    qi = pl.program_id(2)
    ki = pl.program_id(3)
    nk = pl.num_programs(3)
    num_variants = len(bs_list)

    @pl.when(ki == 0)
    def _():
        m_sc[...] = jnp.full_like(m_sc, _MASK_VALUE)
        l_sc[...] = jnp.zeros_like(l_sc)
        acc_sc[...] = jnp.zeros_like(acc_sc)

    # KV tiles strictly above the query tile are fully masked for every variant
    # (a query never attends past its own absolute position) -> skip compute.
    @pl.when(ki <= qi)
    def _():
        q = q_ref[0, 0]     # (T, Dh), softmax scale already folded in
        k = k_ref[0, 0]
        v = v_ref[0, 0]
        # One QK^T per (qi, ki) tile, shared by every MoBA variant.
        s = jax.lax.dot_general(q, k, (((1,), (1,)), ((), ())),
                                preferred_element_type=jnp.float32)   # (T, T)

        row = qi * tile + jax.lax.broadcasted_iota(jnp.int32, (tile, 1), 0)
        col = ki * tile + jax.lax.broadcasted_iota(jnp.int32, (1, tile), 1)

        for vi in range(num_variants):
            bs = bs_list[vi]            # Python int (static)
            kt = kmax_tile_list[vi]     # last kv tile this variant can touch

            def _update(vi=vi, bs=bs):
                # Row-only (T,1) quantities; single broadcast compare for mask.
                if bs == 1:
                    kmax = row                         # plain causal
                else:
                    r = jnp.bitwise_and(row, bs - 1)   # row mod bs (pow2 bs)
                    blk_len = jnp.minimum(bs, seq_len - (row - r))
                    # block_len > 1: allowed keys 0..(row mod bs)  (tril quirk)
                    # block_len ==1: allowed keys 0..row            (causal)
                    kmax = jnp.where(blk_len > 1, r, row)
                sv = jnp.where(col <= kmax, s, _MASK_VALUE)

                m_prev = m_sc[vi]
                m_new = jnp.maximum(m_prev, jnp.max(sv, axis=-1, keepdims=True))
                alpha = jnp.exp(m_prev - m_new)
                p = jnp.exp(sv - m_new)
                l_sc[vi] = alpha * l_sc[vi] + jnp.sum(p, axis=-1, keepdims=True)
                acc_sc[vi] = alpha * acc_sc[vi] + jax.lax.dot_general(
                    p.astype(v.dtype), v, (((1,), (0,)), ((), ())),
                    preferred_element_type=jnp.float32)
                m_sc[vi] = m_new

            if kt >= num_kv_tiles - 1:
                _update()                       # always active -> no guard
            else:
                pl.when(ki <= kt)(_update)      # bs>1 variant: only first tiles

    @pl.when(ki == nk - 1)
    def _():
        out = acc_sc[0] / l_sc[0]
        for vi in range(1, num_variants):
            out = out + acc_sc[vi] / l_sc[vi]
        o_ref[0, 0] = (out * (1.0 / num_variants)).astype(o_ref.dtype)


# --------------------------------------------------------------------------
# Kernel 3: output projection; contracts the full hidden dim per output block
#   ctx: [B, H, S, Dh]; wo: [H, hidden, Dh]; out: [B, S, hidden]
#   grid = (B, S//Ts, hidden//Tn)   (no reduction grid axis)
# --------------------------------------------------------------------------
def _o_proj_kernel(ctx_ref, w_ref, o_ref, *, num_heads):
    dims = (((1,), (1,)), ((), ()))
    acc = jax.lax.dot_general(ctx_ref[0, 0], w_ref[0], dims,
                              preferred_element_type=jnp.float32)
    for h in range(1, num_heads):
        acc = acc + jax.lax.dot_general(ctx_ref[0, h], w_ref[h], dims,
                                        preferred_element_type=jnp.float32)
    o_ref[0] = acc.astype(o_ref.dtype)


# --------------------------------------------------------------------------
# Host-side wrapper
# --------------------------------------------------------------------------
def moba_attention_forward(x, wq, wk, wv, wo, *, num_heads, block_size,
                           num_blocks, attn_tile=None, seq_tile=None,
                           k_tile=None, n_tile=None):
    B, S, hidden = x.shape
    H = num_heads
    assert hidden % H == 0
    Dh = hidden // H
    assert block_size >= 1 and (block_size & (block_size - 1)) == 0, \
        "power-of-two block_size (see TODO in header)"
    scale = 1.0 / math.sqrt(Dh)
    dtype = x.dtype

    Ts = seq_tile or _pick_tile(S, 256, 8)          # seq tile (projections)
    Tk = k_tile or _pick_tile(hidden, 512, 128)     # contraction tile (hidden)
    Tn = n_tile or _pick_tile(hidden, 256, 128)     # output-feature tile
    T = attn_tile or _pick_tile(S, 256, 8)          # q / kv tile (attention)
    assert S % Ts == 0 and S % T == 0 and hidden % Tk == 0 and hidden % Tn == 0
    Hblk = _pick_head_block(H, Dh)

    # nn.Linear weights viewed head-major: q/k/v need only a free reshape; only
    # the small [hidden, hidden] o_proj weight gets relaid out, never activations.
    wq_h = wq.reshape(H, Dh, hidden)
    wk_h = wk.reshape(H, Dh, hidden)
    wv_h = wv.reshape(H, Dh, hidden)
    wo_h = wo.reshape(hidden, H, Dh).transpose(1, 0, 2)   # [H, hidden, Dh]

    # ---- fused QKV projection + head split --------------------------------
    q, k, v = pl.pallas_call(
        functools.partial(_qkv_proj_kernel, scale=scale, heads_per_block=Hblk),
        grid=(B, H // Hblk, S // Ts, hidden // Tk),
        in_specs=[
            pl.BlockSpec((1, Ts, Tk), lambda b, hb, si, ki: (b, si, ki)),
            pl.BlockSpec((Hblk, Dh, Tk), lambda b, hb, si, ki: (hb, 0, ki)),
            pl.BlockSpec((Hblk, Dh, Tk), lambda b, hb, si, ki: (hb, 0, ki)),
            pl.BlockSpec((Hblk, Dh, Tk), lambda b, hb, si, ki: (hb, 0, ki)),
        ],
        out_specs=(
            pl.BlockSpec((1, Hblk, Ts, Dh), lambda b, hb, si, ki: (b, hb, si, 0)),
            pl.BlockSpec((1, Hblk, Ts, Dh), lambda b, hb, si, ki: (b, hb, si, 0)),
            pl.BlockSpec((1, Hblk, Ts, Dh), lambda b, hb, si, ki: (b, hb, si, 0)),
        ),
        out_shape=(
            jax.ShapeDtypeStruct((B, H, S, Dh), dtype),
            jax.ShapeDtypeStruct((B, H, S, Dh), dtype),
            jax.ShapeDtypeStruct((B, H, S, Dh), dtype),
        ),
        scratch_shapes=[pltpu.VMEM((Hblk, Ts, Dh), jnp.float32)
                        for _ in range(3)],
        compiler_params=pltpu.CompilerParams(
            dimension_semantics=("parallel", "parallel", "parallel", "arbitrary"),
            vmem_limit_bytes=_VMEM_LIMIT),
    )(x, wq_h, wk_h, wv_h)

    # ---- MoBA attention ----------------------------------------------------
    nq = S // T
    bs_list = tuple(max(1, block_size // (2 ** v)) for v in range(num_blocks))
    # Last kv tile each variant can ever touch (static per variant):
    #   bs == 1 -> plain causal, needs tiles 0..qi  (kmax tile = nq-1)
    #   bs >  1 -> only absolute keys 0..bs-1        (kmax tile = (bs-1)//T)
    kmax_tile_list = tuple(
        (nq - 1) if bs == 1 else min(nq - 1, (bs - 1) // T) for bs in bs_list)
    nk = max(kmax_tile_list) + 1        # full causal sweep only if a bs==1 variant

    # Scheduler hint reflecting the clamped sweep (ki<=qi and per-variant tiles).
    matmul_tiles = 0
    variant_tiles = 0
    for qi_ in range(nq):
        for ki_ in range(min(qi_, nk - 1) + 1):
            act = sum(1 for kt in kmax_tile_list if ki_ <= kt)
            if act:
                matmul_tiles += 1
                variant_tiles += act
    itemsize = int(jnp.dtype(dtype).itemsize)
    cost = pl.CostEstimate(
        flops=int(2 * B * H * (matmul_tiles + variant_tiles) * T * T * Dh),
        transcendentals=int(B * H * variant_tiles * T * T),
        bytes_accessed=int(itemsize * B * H * Dh * (2 * S + 2 * matmul_tiles * T)),
    )

    def qo_map(b, h, qi, ki):
        return (b, h, qi, 0)

    def kv_map(b, h, qi, ki):
        # Never fetch KV tiles strictly above the query tile (fully masked).
        return (b, h, jnp.minimum(ki, qi), 0)

    ctx = pl.pallas_call(
        functools.partial(_moba_attn_kernel, bs_list=bs_list,
                          kmax_tile_list=kmax_tile_list, num_kv_tiles=nk,
                          seq_len=S, tile=T),
        grid=(B, H, nq, nk),
        in_specs=[
            pl.BlockSpec((1, 1, T, Dh), qo_map),
            pl.BlockSpec((1, 1, T, Dh), kv_map),
            pl.BlockSpec((1, 1, T, Dh), kv_map),
        ],
        out_specs=pl.BlockSpec((1, 1, T, Dh), qo_map),
        out_shape=jax.ShapeDtypeStruct((B, H, S, Dh), dtype),
        scratch_shapes=[
            pltpu.VMEM((num_blocks, T, 1), jnp.float32),    # per-variant row max
            pltpu.VMEM((num_blocks, T, 1), jnp.float32),    # per-variant denom
            pltpu.VMEM((num_blocks, T, Dh), jnp.float32),   # per-variant context
        ],
        compiler_params=pltpu.CompilerParams(
            dimension_semantics=("parallel", "parallel", "parallel", "arbitrary"),
            vmem_limit_bytes=_VMEM_LIMIT),
        cost_estimate=cost,
    )(q, k, v)

    # ---- output projection + head merge ------------------------------------
    out = pl.pallas_call(
        functools.partial(_o_proj_kernel, num_heads=H),
        grid=(B, S // Ts, hidden // Tn),
        in_specs=[
            pl.BlockSpec((1, H, Ts, Dh), lambda b, si, ni: (b, 0, si, 0)),
            pl.BlockSpec((H, Tn, Dh), lambda b, si, ni: (0, ni, 0)),
        ],
        out_specs=pl.BlockSpec((1, Ts, Tn), lambda b, si, ni: (b, si, ni)),
        out_shape=jax.ShapeDtypeStruct((B, S, hidden), dtype),
        compiler_params=pltpu.CompilerParams(
            dimension_semantics=("parallel", "parallel", "parallel"),
            vmem_limit_bytes=_VMEM_LIMIT),
    )(ctx, wo_h)
    return out


# --------------------------------------------------------------------------
# Pure-JAX reference (mirrors the PyTorch forward, eval mode)
# --------------------------------------------------------------------------
def reference_forward(x, wq, wk, wv, wo, *, num_heads, block_size, num_blocks):
    B, S, Hd = x.shape
    Dh = Hd // num_heads
    scale = 1.0 / math.sqrt(Dh)

    def split(y):
        return y.reshape(B, S, num_heads, Dh).transpose(0, 2, 1, 3)

    q, k, v = split(x @ wq.T), split(x @ wk.T), split(x @ wv.T)

    ctxs = []
    for bi in range(num_blocks):
        bs = max(1, block_size // (2 ** bi))
        ctx = jnp.zeros_like(q)
        for i in range(math.ceil(S / bs)):
            start, end = i * bs, min(i * bs + bs, S)
            bl = end - start
            bq = q[:, :, start:end, :]
            bk = k[:, :, :end, :]
            bv = v[:, :, :end, :]
            sc = jnp.einsum("bhqd,bhkd->bhqk", bq, bk) * scale
            if bl > 1:
                tri = jnp.tril(jnp.ones((bl, end)))
                sc = jnp.where(tri == 0, -jnp.inf, sc)
            p = jax.nn.softmax(sc, axis=-1)
            bc = jnp.einsum("bhqk,bhkd->bhqd", p, bv)
            ctx = ctx.at[:, :, start:end, :].set(bc)
        ctxs.append(ctx)
    ctx = sum(ctxs) / num_blocks
    ctx = ctx.transpose(0, 2, 1, 3).reshape(B, S, Hd)
    return ctx @ wo.T


def _run_case(key, *, B, S, hidden, num_heads, block_size, num_blocks, **tiles):
    kx, kq, kk, kv, ko = jax.random.split(key, 5)
    x = jax.random.normal(kx, (B, S, hidden), dtype=jnp.float32)
    wq = 0.05 * jax.random.normal(kq, (hidden, hidden), dtype=jnp.float32)
    wk = 0.05 * jax.random.normal(kk, (hidden, hidden), dtype=jnp.float32)
    wv = 0.05 * jax.random.normal(kv, (hidden, hidden), dtype=jnp.float32)
    wo = 0.05 * jax.random.normal(ko, (hidden, hidden), dtype=jnp.float32)

    out = moba_attention_forward(
        x, wq, wk, wv, wo, num_heads=num_heads, block_size=block_size,
        num_blocks=num_blocks, **tiles)
    out = jax.block_until_ready(out)

    ref = reference_forward(
        x, wq, wk, wv, wo, num_heads=num_heads, block_size=block_size,
        num_blocks=num_blocks)
    ref = jax.block_until_ready(ref)

    np.testing.assert_allclose(np.asarray(out), np.asarray(ref),
                               rtol=2e-3, atol=2e-3)


# --------------------------------------------------------------------------
# Main
# --------------------------------------------------------------------------
if __name__ == "__main__":
    key = jax.random.PRNGKey(0)
    k1, k2, k3 = jax.random.split(key, 3)

    # Small config matching the module defaults in miniature.
    _run_case(k1, B=2, S=8, hidden=32, num_heads=2, block_size=8, num_blocks=4)

    # No bs==1 variant: the kv grid collapses to the ceil(block_size/T) tiles;
    # also exercises the K-reduction of the fused QKV projection and N-tiling
    # of the o_proj.
    _run_case(k2, B=1, S=64, hidden=256, num_heads=2, block_size=16,
              num_blocks=3, attn_tile=16, seq_tile=32, k_tile=128, n_tile=128)

    # Config with a fully-causal (bs==1) variant and a block spanning two kv
    # tiles: exercises the multi-tile online softmax, per-variant kv guards,
    # the ki<=qi clamp and dead-step skipping.
    _run_case(k3, B=1, S=64, hidden=128, num_heads=2, block_size=32,
              num_blocks=6, attn_tile=16)

    print("KERNEL_OK")
</pallas_src>

<mosaic_0001>
module attributes {stable_mosaic.version = 11 : i64} {
  func.func @_qkv_proj_kernel(%arg0: i32, %arg1: i32, %arg2: i32, %arg3: i32, %arg4: memref<1x8x32xf32, #tpu.memory_space<vmem>>, %arg5: memref<2x16x32xf32, #tpu.memory_space<vmem>>, %arg6: memref<2x16x32xf32, #tpu.memory_space<vmem>>, %arg7: memref<2x16x32xf32, #tpu.memory_space<vmem>>, %arg8: memref<1x2x8x16xf32, #tpu.memory_space<vmem>>, %arg9: memref<1x2x8x16xf32, #tpu.memory_space<vmem>>, %arg10: memref<1x2x8x16xf32, #tpu.memory_space<vmem>>, %arg11: memref<2x8x16xf32, #tpu.memory_space<vmem>>, %arg12: memref<2x8x16xf32, #tpu.memory_space<vmem>>, %arg13: memref<2x8x16xf32, #tpu.memory_space<vmem>>) attributes {dimension_semantics = [#tpu.dimension_semantics<parallel>, #tpu.dimension_semantics<parallel>, #tpu.dimension_semantics<parallel>, #tpu.dimension_semantics<arbitrary>], iteration_bounds = array<i64: 2, 1, 1, 1>, scalar_prefetch = 0 : i64, scratch_operands = 3 : i64, tpu.core_type = #tpu.core_type<tc>, window_params = [{transform_indices = @transform_0, window_bounds = array<i64: 1, 8, 32>}, {transform_indices = @transform_1, window_bounds = array<i64: 2, 16, 32>}, {transform_indices = @transform_2, window_bounds = array<i64: 2, 16, 32>}, {transform_indices = @transform_3, window_bounds = array<i64: 2, 16, 32>}, {transform_indices = @transform_4, window_bounds = array<i64: 1, 2, 8, 16>}, {transform_indices = @transform_5, window_bounds = array<i64: 1, 2, 8, 16>}, {transform_indices = @transform_6, window_bounds = array<i64: 1, 2, 8, 16>}]} {
    %c0_i32 = arith.constant 0 : i32
    %0 = arith.cmpi eq, %arg3, %c0_i32 : i32
    %1 = arith.extui %0 : i1 to i32
    %c0_i32_0 = arith.constant 0 : i32
    %2 = arith.cmpi ne, %1, %c0_i32_0 : i32
    scf.if %2 {
      %cst_63 = arith.constant 0.000000e+00 : f32
      %62 = vector.broadcast %cst_63 : f32 to vector<2x8x16xf32>
      %c0_64 = arith.constant 0 : index
      %c0_65 = arith.constant 0 : index
      %c0_66 = arith.constant 0 : index
      %63 = vector.load %arg11[%c0_64, %c0_65, %c0_66] : memref<2x8x16xf32, #tpu.memory_space<vmem>>, vector<2x8x16xf32>
      tpu.vector_store %arg11[%c0_64, %c0_65, %c0_66], %62 {strides = array<i32>} : memref<2x8x16xf32, #tpu.memory_space<vmem>>, vector<2x8x16xf32>,
      %cst_67 = arith.constant 0.000000e+00 : f32
      %64 = vector.broadcast %cst_67 : f32 to vector<2x8x16xf32>
      %c0_68 = arith.constant 0 : index
      %c0_69 = arith.constant 0 : index
      %c0_70 = arith.constant 0 : index
      %65 = vector.load %arg12[%c0_68, %c0_69, %c0_70] : memref<2x8x16xf32, #tpu.memory_space<vmem>>, vector<2x8x16xf32>
      tpu.vector_store %arg12[%c0_68, %c0_69, %c0_70], %64 {strides = array<i32>} : memref<2x8x16xf32, #tpu.memory_space<vmem>>, vector<2x8x16xf32>,
      %cst_71 = arith.constant 0.000000e+00 : f32
      %66 = vector.broadcast %cst_71 : f32 to vector<2x8x16xf32>
      %c0_72 = arith.constant 0 : index
      %c0_73 = arith.constant 0 : index
      %c0_74 = arith.constant 0 : index
      %67 = vector.load %arg13[%c0_72, %c0_73, %c0_74] : memref<2x8x16xf32, #tpu.memory_space<vmem>>, vector<2x8x16xf32>
      tpu.vector_store %arg13[%c0_72, %c0_73, %c0_74], %66 {strides = array<i32>} : memref<2x8x16xf32, #tpu.memory_space<vmem>>, vector<2x8x16xf32>,
    } else {
    }
    %c0 = arith.constant 0 : index
    %c0_1 = arith.constant 0 : index
    %c0_2 = arith.constant 0 : index
    %3 = vector.load %arg4[%c0, %c0_1, %c0_2] : memref<1x8x32xf32, #tpu.memory_space<vmem>>, vector<1x8x32xf32>
    %4 = vector.shape_cast %3 : vector<1x8x32xf32> to vector<8x32xf32>
    %c0_3 = arith.constant 0 : index
    %c0_4 = arith.constant 0 : index
    %c0_5 = arith.constant 0 : index
    %5 = vector.load %arg11[%c0_3, %c0_4, %c0_5] : memref<2x8x16xf32, #tpu.memory_space<vmem>>, vector<1x8x16xf32>
    %6 = vector.shape_cast %5 : vector<1x8x16xf32> to vector<8x16xf32>
    %c0_6 = arith.constant 0 : index
    %c0_7 = arith.constant 0 : index
    %c0_8 = arith.constant 0 : index
    %7 = vector.load %arg5[%c0_6, %c0_7, %c0_8] : memref<2x16x32xf32, #tpu.memory_space<vmem>>, vector<1x16x32xf32>
    %8 = vector.shape_cast %7 : vector<1x16x32xf32> to vector<16x32xf32>
    %cst = arith.constant dense<0.000000e+00> : vector<8x16xf32>
    %9 = tpu.matmul %4, %8, %cst {dimension_numbers = #tpu.dot_dimension_numbers<[1], [1], [0], [0], [0, 0, 1, 0], [], []>} : vector<8x32xf32>, vector<16x32xf32>, vector<8x16xf32> -> vector<8x16xf32>
    %10 = arith.addf %6, %9 : vector<8x16xf32>
    %c0_9 = arith.constant 0 : index
    %c0_10 = arith.constant 0 : index
    %c0_11 = arith.constant 0 : index
    %11 = vector.load %arg11[%c0_9, %c0_10, %c0_11] : memref<2x8x16xf32, #tpu.memory_space<vmem>>, vector<1x8x16xf32>
    %12 = vector.shape_cast %11 : vector<1x8x16xf32> to vector<8x16xf32>
    %13 = vector.shape_cast %10 : vector<8x16xf32> to vector<1x8x16xf32>
    tpu.vector_store %arg11[%c0_9, %c0_10, %c0_11], %13 {strides = array<i32>} : memref<2x8x16xf32, #tpu.memory_space<vmem>>, vector<1x8x16xf32>,
    %c0_12 = arith.constant 0 : index
    %c0_13 = arith.constant 0 : index
    %c0_14 = arith.constant 0 : index
    %14 = vector.load %arg12[%c0_12, %c0_13, %c0_14] : memref<2x8x16xf32, #tpu.memory_space<vmem>>, vector<1x8x16xf32>
    %15 = vector.shape_cast %14 : vector<1x8x16xf32> to vector<8x16xf32>
    %c0_15 = arith.constant 0 : index
    %c0_16 = arith.constant 0 : index
    %c0_17 = arith.constant 0 : index
    %16 = vector.load %arg6[%c0_15, %c0_16, %c0_17] : memref<2x16x32xf32, #tpu.memory_space<vmem>>, vector<1x16x32xf32>
    %17 = vector.shape_cast %16 : vector<1x16x32xf32> to vector<16x32xf32>
    %cst_18 = arith.constant dense<0.000000e+00> : vector<8x16xf32>
    %18 = tpu.matmul %4, %17, %cst_18 {dimension_numbers = #tpu.dot_dimension_numbers<[1], [1], [0], [0], [0, 0, 1, 0], [], []>} : vector<8x32xf32>, vector<16x32xf32>, vector<8x16xf32> -> vector<8x16xf32>
    %19 = arith.addf %15, %18 : vector<8x16xf32>
    %c0_19 = arith.constant 0 : index
    %c0_20 = arith.constant 0 : index
    %c0_21 = arith.constant 0 : index
    %20 = vector.load %arg12[%c0_19, %c0_20, %c0_21] : memref<2x8x16xf32, #tpu.memory_space<vmem>>, vector<1x8x16xf32>
    %21 = vector.shape_cast %20 : vector<1x8x16xf32> to vector<8x16xf32>
    %22 = vector.shape_cast %19 : vector<8x16xf32> to vector<1x8x16xf32>
    tpu.vector_store %arg12[%c0_19, %c0_20, %c0_21], %22 {strides = array<i32>} : memref<2x8x16xf32, #tpu.memory_space<vmem>>, vector<1x8x16xf32>,
    %c0_22 = arith.constant 0 : index
    %c0_23 = arith.constant 0 : index
    %c0_24 = arith.constant 0 : index
    %23 = vector.load %arg13[%c0_22, %c0_23, %c0_24] : memref<2x8x16xf32, #tpu.memory_space<vmem>>, vector<1x8x16xf32>
    %24 = vector.shape_cast %23 : vector<1x8x16xf32> to vector<8x16xf32>
    %c0_25 = arith.constant 0 : index
    %c0_26 = arith.constant 0 : index
    %c0_27 = arith.constant 0 : index
    %25 = vector.load %arg7[%c0_25, %c0_26, %c0_27] : memref<2x16x32xf32, #tpu.memory_space<vmem>>, vector<1x16x32xf32>
    %26 = vector.shape_cast %25 : vector<1x16x32xf32> to vector<16x32xf32>
    %cst_28 = arith.constant dense<0.000000e+00> : vector<8x16xf32>
    %27 = tpu.matmul %4, %26, %cst_28 {dimension_numbers = #tpu.dot_dimension_numbers<[1], [1], [0], [0], [0, 0, 1, 0], [], []>} : vector<8x32xf32>, vector<16x32xf32>, vector<8x16xf32> -> vector<8x16xf32>
    %28 = arith.addf %24, %27 : vector<8x16xf32>
    %c0_29 = arith.constant 0 : index
    %c0_30 = arith.constant 0 : index
    %c0_31 = arith.constant 0 : index
    %29 = vector.load %arg13[%c0_29, %c0_30, %c0_31] : memref<2x8x16xf32, #tpu.memory_space<vmem>>, vector<1x8x16xf32>
    %30 = vector.shape_cast %29 : vector<1x8x16xf32> to vector<8x16xf32>
    %31 = vector.shape_cast %28 : vector<8x16xf32> to vector<1x8x16xf32>
    tpu.vector_store %arg13[%c0_29, %c0_30, %c0_31], %31 {strides = array<i32>} : memref<2x8x16xf32, #tpu.memory_space<vmem>>, vector<1x8x16xf32>,
    %c1 = arith.constant 1 : index
    %c0_32 = arith.constant 0 : index
    %c0_33 = arith.constant 0 : index
    %32 = vector.load %arg11[%c1, %c0_32, %c0_33] : memref<2x8x16xf32, #tpu.memory_space<vmem>>, vector<1x8x16xf32>
    %33 = vector.shape_cast %32 : vector<1x8x16xf32> to vector<8x16xf32>
    %c1_34 = arith.constant 1 : index
    %c0_35 = arith.constant 0 : index
    %c0_36 = arith.constant 0 : index
    %34 = vector.load %arg5[%c1_34, %c0_35, %c0_36] : memref<2x16x32xf32, #tpu.memory_space<vmem>>, vector<1x16x32xf32>
    %35 = vector.shape_cast %34 : vector<1x16x32xf32> to vector<16x32xf32>
    %cst_37 = arith.constant dense<0.000000e+00> : vector<8x16xf32>
    %36 = tpu.matmul %4, %35, %cst_37 {dimension_numbers = #tpu.dot_dimension_numbers<[1], [1], [0], [0], [0, 0, 1, 0], [], []>} : vector<8x32xf32>, vector<16x32xf32>, vector<8x16xf32> -> vector<8x16xf32>
    %37 = arith.addf %33, %36 : vector<8x16xf32>
    %c1_38 = arith.constant 1 : index
    %c0_39 = arith.constant 0 : index
    %c0_40 = arith.constant 0 : index
    %38 = vector.load %arg11[%c1_38, %c0_39, %c0_40] : memref<2x8x16xf32, #tpu.memory_space<vmem>>, vector<1x8x16xf32>
    %39 = vector.shape_cast %38 : vector<1x8x16xf32> to vector<8x16xf32>
    %40 = vector.shape_cast %37 : vector<8x16xf32> to vector<1x8x16xf32>
    tpu.vector_store %arg11[%c1_38, %c0_39, %c0_40], %40 {strides = array<i32>} : memref<2x8x16xf32, #tpu.memory_space<vmem>>, vector<1x8x16xf32>,
    %c1_41 = arith.constant 1 : index
    %c0_42 = arith.constant 0 : index
    %c0_43 = arith.constant 0 : index
    %41 = vector.load %arg12[%c1_41, %c0_42, %c0_43] : memref<2x8x16xf32, #tpu.memory_space<vmem>>, vector<1x8x16xf32>
    %42 = vector.shape_cast %41 : vector<1x8x16xf32> to vector<8x16xf32>
    %c1_44 = arith.constant 1 : index
    %c0_45 = arith.constant 0 : index
    %c0_46 = arith.constant 0 : index
    %43 = vector.load %arg6[%c1_44, %c0_45, %c0_46] : memref<2x16x32xf32, #tpu.memory_space<vmem>>, vector<1x16x32xf32>
    %44 = vector.shape_cast %43 : vector<1x16x32xf32> to vector<16x32xf32>
    %cst_47 = arith.constant dense<0.000000e+00> : vector<8x16xf32>
    %45 = tpu.matmul %4, %44, %cst_47 {dimension_numbers = #tpu.dot_dimension_numbers<[1], [1], [0], [0], [0, 0, 1, 0], [], []>} : vector<8x32xf32>, vector<16x32xf32>, vector<8x16xf32> -> vector<8x16xf32>
    %46 = arith.addf %42, %45 : vector<8x16xf32>
    %c1_48 = arith.constant 1 : index
    %c0_49 = arith.constant 0 : index
    %c0_50 = arith.constant 0 : index
    %47 = vector.load %arg12[%c1_48, %c0_49, %c0_50] : memref<2x8x16xf32, #tpu.memory_space<vmem>>, vector<1x8x16xf32>
    %48 = vector.shape_cast %47 : vector<1x8x16xf32> to vector<8x16xf32>
    %49 = vector.shape_cast %46 : vector<8x16xf32> to vector<1x8x16xf32>
    tpu.vector_store %arg12[%c1_48, %c0_49, %c0_50], %49 {strides = array<i32>} : memref<2x8x16xf32, #tpu.memory_space<vmem>>, vector<1x8x16xf32>,
    %c1_51 = arith.constant 1 : index
    %c0_52 = arith.constant 0 : index
    %c0_53 = arith.constant 0 : index
    %50 = vector.load %arg13[%c1_51, %c0_52, %c0_53] : memref<2x8x16xf32, #tpu.memory_space<vmem>>, vector<1x8x16xf32>
    %51 = vector.shape_cast %50 : vector<1x8x16xf32> to vector<8x16xf32>
    %c1_54 = arith.constant 1 : index
    %c0_55 = arith.constant 0 : index
    %c0_56 = arith.constant 0 : index
    %52 = vector.load %arg7[%c1_54, %c0_55, %c0_56] : memref<2x16x32xf32, #tpu.memory_space<vmem>>, vector<1x16x32xf32>
    %53 = vector.shape_cast %52 : vector<1x16x32xf32> to vector<16x32xf32>
    %cst_57 = arith.constant dense<0.000000e+00> : vector<8x16xf32>
    %54 = tpu.matmul %4, %53, %cst_57 {dimension_numbers = #tpu.dot_dimension_numbers<[1], [1], [0], [0], [0, 0, 1, 0], [], []>} : vector<8x32xf32>, vector<16x32xf32>, vector<8x16xf32> -> vector<8x16xf32>
    %55 = arith.addf %51, %54 : vector<8x16xf32>
    %c1_58 = arith.constant 1 : index
    %c0_59 = arith.constant 0 : index
    %c0_60 = arith.constant 0 : index
    %56 = vector.load %arg13[%c1_58, %c0_59, %c0_60] : memref<2x8x16xf32, #tpu.memory_space<vmem>>, vector<1x8x16xf32>
    %57 = vector.shape_cast %56 : vector<1x8x16xf32> to vector<8x16xf32>
    %58 = vector.shape_cast %55 : vector<8x16xf32> to vector<1x8x16xf32>
    tpu.vector_store %arg13[%c1_58, %c0_59, %c0_60], %58 {strides = array<i32>} : memref<2x8x16xf32, #tpu.memory_space<vmem>>, vector<1x8x16xf32>,
    %c0_i32_61 = arith.constant 0 : i32
    %59 = arith.cmpi eq, %arg3, %c0_i32_61 : i32
    %60 = arith.extui %59 : i1 to i32
    %c0_i32_62 = arith.constant 0 : i32
    %61 = arith.cmpi ne, %60, %c0_i32_62 : i32
    scf.if %61 {
      %c0_63 = arith.constant 0 : index
      %c0_64 = arith.constant 0 : index
      %c0_65 = arith.constant 0 : index
      %62 = vector.load %arg11[%c0_63, %c0_64, %c0_65] : memref<2x8x16xf32, #tpu.memory_space<vmem>>, vector<2x8x16xf32>
      %cst_66 = arith.constant 2.500000e-01 : f32
      %63 = vector.broadcast %cst_66 : f32 to vector<2x8x16xf32>
      %64 = arith.mulf %62, %63 : vector<2x8x16xf32>
      %c0_67 = arith.constant 0 : index
      %c0_68 = arith.constant 0 : index
      %c0_69 = arith.constant 0 : index
      %c0_70 = arith.constant 0 : index
      %65 = vector.load %arg8[%c0_67, %c0_68, %c0_69, %c0_70] : memref<1x2x8x16xf32, #tpu.memory_space<vmem>>, vector<1x2x8x16xf32>
      %66 = vector.shape_cast %65 : vector<1x2x8x16xf32> to vector<2x8x16xf32>
      %67 = vector.shape_cast %64 : vector<2x8x16xf32> to vector<1x2x8x16xf32>
      tpu.vector_store %arg8[%c0_67, %c0_68, %c0_69, %c0_70], %67 {strides = array<i32>} : memref<1x2x8x16xf32, #tpu.memory_space<vmem>>, vector<1x2x8x16xf32>,
      %c0_71 = arith.constant 0 : index
      %c0_72 = arith.constant 0 : index
      %c0_73 = arith.constant 0 : index
      %68 = vector.load %arg12[%c0_71, %c0_72, %c0_73] : memref<2x8x16xf32, #tpu.memory_space<vmem>>, vector<2x8x16xf32>
      %c0_74 = arith.constant 0 : index
      %c0_75 = arith.constant 0 : index
      %c0_76 = arith.constant 0 : index
      %c0_77 = arith.constant 0 : index
      %69 = vector.load %arg9[%c0_74, %c0_75, %c0_76, %c0_77] : memref<1x2x8x16xf32, #tpu.memory_space<vmem>>, vector<1x2x8x16xf32>
      %70 = vector.shape_cast %69 : vector<1x2x8x16xf32> to vector<2x8x16xf32>
      %71 = vector.shape_cast %68 : vector<2x8x16xf32> to vector<1x2x8x16xf32>
      tpu.vector_store %arg9[%c0_74, %c0_75, %c0_76, %c0_77], %71 {strides = array<i32>} : memref<1x2x8x16xf32, #tpu.memory_space<vmem>>, vector<1x2x8x16xf32>,
      %c0_78 = arith.constant 0 : index
      %c0_79 = arith.constant 0 : index
      %c0_80 = arith.constant 0 : index
      %72 = vector.load %arg13[%c0_78, %c0_79, %c0_80] : memref<2x8x16xf32, #tpu.memory_space<vmem>>, vector<2x8x16xf32>
      %c0_81 = arith.constant 0 : index
      %c0_82 = arith.constant 0 : index
      %c0_83 = arith.constant 0 : index
      %c0_84 = arith.constant 0 : index
      %73 = vector.load %arg10[%c0_81, %c0_82, %c0_83, %c0_84] : memref<1x2x8x16xf32, #tpu.memory_space<vmem>>, vector<1x2x8x16xf32>
      %74 = vector.shape_cast %73 : vector<1x2x8x16xf32> to vector<2x8x16xf32>
      %75 = vector.shape_cast %72 : vector<2x8x16xf32> to vector<1x2x8x16xf32>
      tpu.vector_store %arg10[%c0_81, %c0_82, %c0_83, %c0_84], %75 {strides = array<i32>} : memref<1x2x8x16xf32, #tpu.memory_space<vmem>>, vector<1x2x8x16xf32>,
    } else {
    }
    return
  }
  func.func @transform_0(%arg0: i32, %arg1: i32, %arg2: i32, %arg3: i32) -> (i32, i32, i32) {
    %c0_i32 = arith.constant 0 : i32
    return %arg0, %arg2, %arg3 : i32, i32, i32
  }
  func.func @transform_1(%arg0: i32, %arg1: i32, %arg2: i32, %arg3: i32) -> (i32, i32, i32) {
    %c0_i32 = arith.constant 0 : i32
    %c0_i32_0 = arith.constant 0 : i32
    return %arg1, %c0_i32, %arg3 : i32, i32, i32
  }
  func.func @transform_2(%arg0: i32, %arg1: i32, %arg2: i32, %arg3: i32) -> (i32, i32, i32) {
    %c0_i32 = arith.constant 0 : i32
    %c0_i32_0 = arith.constant 0 : i32
    return %arg1, %c0_i32, %arg3 : i32, i32, i32
  }
  func.func @transform_3(%arg0: i32, %arg1: i32, %arg2: i32, %arg3: i32) -> (i32, i32, i32) {
    %c0_i32 = arith.constant 0 : i32
    %c0_i32_0 = arith.constant 0 : i32
    return %arg1, %c0_i32, %arg3 : i32, i32, i32
  }
  func.func @transform_4(%arg0: i32, %arg1: i32, %arg2: i32, %arg3: i32) -> (i32, i32, i32, i32) {
    %c0_i32 = arith.constant 0 : i32
    %c0_i32_0 = arith.constant 0 : i32
    return %arg0, %arg1, %arg2, %c0_i32 : i32, i32, i32, i32
  }
  func.func @transform_5(%arg0: i32, %arg1: i32, %arg2: i32, %arg3: i32) -> (i32, i32, i32, i32) {
    %c0_i32 = arith.constant 0 : i32
    %c0_i32_0 = arith.constant 0 : i32
    return %arg0, %arg1, %arg2, %c0_i32 : i32, i32, i32, i32
  }
  func.func @transform_6(%arg0: i32, %arg1: i32, %arg2: i32, %arg3: i32) -> (i32, i32, i32, i32) {
    %c0_i32 = arith.constant 0 : i32
    %c0_i32_0 = arith.constant 0 : i32
    return %arg0, %arg1, %arg2, %c0_i32 : i32, i32, i32, i32
  }
}

</mosaic_0001>

<llo_original>
// kernel: tpu_custom_call.1
$region0: #{tpu_custom_call.1}
  #allocation0 [shape = 'u32[]', space=smem, size = 0x4, offset = 0x4, fixed_abs, tag = 'smem constant byte address 0x4 - core index']
  #allocation1 [shape = 'u32[144,128]{1,0:T(1,128)}', space=vmem, size = 0x12000, scoped, tag = 'internal scratch']
  #allocation2 [shape = 'f32[2,8,16]{2,1,0:T(8,128)}', space=vmem, size = 0x2000, scoped, tag = 'scratch operand']
  #allocation3 [shape = 'f32[2,8,16]{2,1,0:T(8,128)}', space=vmem, size = 0x2000, scoped, tag = 'scratch operand']
  #allocation4 [shape = 'f32[2,8,16]{2,1,0:T(8,128)}', space=vmem, size = 0x2000, scoped, tag = 'scratch operand']
  %s0 = inlined_call_operand.hbm [shape: f32[2,8,32], index: 0, kind: input, shape index: {}]
  %s1 = inlined_call_operand.hbm [shape: f32[2,16,32], index: 1, kind: input, shape index: {}]
  %s2 = inlined_call_operand.hbm [shape: f32[2,16,32], index: 2, kind: input, shape index: {}]
  %s3 = inlined_call_operand.hbm [shape: f32[2,16,32], index: 3, kind: input, shape index: {}]
  %s4 = inlined_call_operand.hbm [shape: f32[2,2,8,16], index: 4, kind: output, shape index: {0}]
  %s5 = inlined_call_operand.hbm [shape: f32[2,2,8,16], index: 5, kind: output, shape index: {1}]
  %s6 = inlined_call_operand.hbm [shape: f32[2,2,8,16], index: 6, kind: output, shape index: {2}]
  %7 = xla_tuple %s4, %s5, %s6
  %s8 = sld [smem:[#allocation0]]
  $region89: #{tpu_custom_call.1} parent=0
    _
  %s10 = ssub.s32 1, %s8
  %s11 = scalar_select 0, %s10, %s8
  $region1: #{tpu_custom_call.1} parent=0
    #allocation5 [shape = 'u8[8192]{0}', space=vmem, size = 0x2000, scoped, tag = 'input window, operand 0']
    #allocation6 [shape = 's32[2]{0}', space=sflag, size = 0x8, scoped, tag = 'scoped memory for tpu_custom_call.1']
    #allocation7 [shape = 's32[2]{0}', space=sflag, size = 0x8, scoped, tag = 'scoped memory for tpu_custom_call.1']
    #allocation8 [shape = 'u8[16384]{0}', space=vmem, size = 0x4000, scoped, tag = 'input window, operand 1, single buffered']
    #allocation9 [shape = 's32[1]{0}', space=sflag, size = 0x4, scoped, tag = 'scoped memory for tpu_custom_call.1']
    #allocation10 [shape = 'u8[16384]{0}', space=vmem, size = 0x4000, scoped, tag = 'input window, operand 2, single buffered']
    #allocation11 [shape = 'u8[16384]{0}', space=vmem, size = 0x4000, scoped, tag = 'input window, operand 3, single buffered']
    #allocation12 [shape = 's32[1]{0}', space=sflag, size = 0x4, scoped, tag = 'scoped memory for tpu_custom_call.1']
    #allocation13 [shape = 'u8[16384]{0}', space=vmem, size = 0x4000, scoped, tag = 'output window, operand 0']
    #allocation14 [shape = 'u8[16384]{0}', space=vmem, size = 0x4000, scoped, tag = 'output window, operand 1']
    #allocation15 [shape = 's32[2]{0}', space=sflag, size = 0x8, scoped, tag = 'scoped memory for tpu_custom_call.1']
    #allocation16 [shape = 'u8[16384]{0}', space=vmem, size = 0x4000, scoped, tag = 'output window, operand 2']
    %12 = vsyncpa [#allocation6], 0
    %s13 = scalar_lea.sflag [#allocation6], 1
    %14 = vsyncpa %s13, 0
    %15 = vsyncpa [#allocation9], 0
    %16 = vsyncpa [#allocation12], 0
    %17 = vsyncpa [#allocation7], 0
    %s18 = scalar_lea.sflag [#allocation7], 1
    %19 = vsyncpa %s18, 0
    %20 = vsyncpa [#allocation15], 0
    %s21 = scalar_lea.sflag [#allocation15], 1
    %22 = vsyncpa %s21, 0
    loop: start=0, step=1, limit=4
    $region2: #{tpu_custom_call.1} parent=1 // loop_pre_header
      _
    $region3: #{tpu_custom_call.1} parent=1 // loop_header
      %s24 = sphi 0, %s28
      %p25 = scmp.ge.s32.totalorder %s24, 4
      %s31 = sphi 0, %s57
      %s32 = sphi 0, %s53
      %s33 = sphi 0, %s49
      %s34 = sphi 0, %s45
      %s35 = sphi 0, %s31
      %s36 = sphi 0, %s32
      %s37 = sphi 0, %s33
      %s38 = sphi 0, %s34
      %s39 = sphi 0, %s35
      %s40 = sphi 0, %s36
      %s41 = sphi 0, %s37
      %s42 = sphi 0, %s38
      %s64 = sphi 0, %s66
      %s67 = sphi 0, %s64
      %s68 = sphi 0, %s67
      %s84 = sphi 0, %s68
      %s92 = sphi 0, %s94
      %s95 = sphi 0, %s92
      %s96 = sphi 0, %s95
      %s112 = sphi 0, %s96
      %s120 = sphi 0, %s122
      %s123 = sphi 0, %s120
      %s124 = sphi 0, %s123
      %s140 = sphi 0, %s124
      %s148 = sphi 0, %s150
      %s151 = sphi 0, %s148
      %s152 = sphi 0, %s151
      %s168 = sphi 0, %s152
      %s178 = sphi 0, %s180
      %s181 = sphi 0, %s178
      %s182 = sphi 0, %s181
      %s198 = sphi 0, %s182
      %s208 = sphi 0, %s210
      %s211 = sphi 0, %s208
      %s212 = sphi 0, %s211
      %s228 = sphi 0, %s212
      %s238 = sphi 0, %s240
      %s241 = sphi 0, %s238
      %s242 = sphi 0, %s241
      %s258 = sphi 0, %s242
    $region4: #{tpu_custom_call.1} parent=1 // loop_header_branch
      %27 = sbr.rel (%p25) target = $region8
    $region5: #{tpu_custom_call.1} parent=1 // loop_body
      %s29 = ssub.s32 %s24, 1
      %s30 = ssub.s32 %s24, 2
      %s43 = sadd.s32 1, %s34
      %p44 = scmp.ge.s32.totalorder %s43, 1
      %s45 = scalar_select %p44, 0, %s43
      %s46 = sadd.s32 1, %s33
      %s47 = scalar_select %p44, %s46, %s33
      %p48 = scmp.ge.s32.totalorder %s47, 1
      %s49 = scalar_select %p48, 0, %s47
      %s50 = sadd.s32 1, %s32
      %s51 = scalar_select %p48, %s50, %s32
      %p52 = scmp.ge.s32.totalorder %s51, 1
      %s53 = scalar_select %p52, 0, %s51
      %s54 = sadd.s32 1, %s31
      %s55 = scalar_select %p52, %s54, %s31
      %p56 = scmp.ge.s32.totalorder %s55, 2
      %s57 = scalar_select %p56, 0, %s55
      %s58 = ssub.s32 %s31, %s57
      %s59 = ssub.s32 %s33, %s49
      %s60 = sor.u32 %s58, %s59
      %s61 = ssub.s32 %s34, %s45
      %s62 = sor.u32 %s60, %s61
      %p63 = scmp.eq.s32.totalorder %s62, 0
      %s65 = sadd.s32 %s64, 1
      %s66 = scalar_select %p63, %s64, %s65
      %p69 = pneg %p63
      %p70 = scmp.eq.s32.totalorder %s24, 1
      %p71 = por %p69, %p70
      %p72 = scmp.ne.s32.totalorder %s64, %s67
      %p73 = scmp.eq.s32.totalorder %s24, 0
      %p74 = por %p72, %p73
      %p75 = scmp.ne.s32.totalorder %s64, %s67
      %p76 = scmp.eq.s32.totalorder %s29, 1
      %p77 = por %p75, %p76
      %p78 = scmp.ne.s32.totalorder %s67, %s68
      %p79 = scmp.eq.s32.totalorder %s29, 0
      %p80 = por %p78, %p79
      %p81 = scmp.ne.s32.totalorder %s67, %s68
      %p82 = scmp.eq.s32.totalorder %s30, 1
      %p83 = por %p81, %p82
      %p85 = scmp.ne.s32.totalorder %s68, %s84
      %p86 = scmp.eq.s32.totalorder %s30, 0
      %p87 = por %p85, %p86
      %s88 = ssub.s32 %s32, %s53
      %s89 = ssub.s32 %s34, %s45
      %s90 = sor.u32 %s88, %s89
      %p91 = scmp.eq.s32.totalorder %s90, 0
      %s93 = sadd.s32 %s92, 1
      %s94 = scalar_select %p91, %s92, %s93
      %p97 = pneg %p91
      %p98 = scmp.eq.s32.totalorder %s24, 1
      %p99 = por %p97, %p98
      %p100 = scmp.ne.s32.totalorder %s92, %s95
      %p101 = scmp.eq.s32.totalorder %s24, 0
      %p102 = por %p100, %p101
      %p103 = scmp.ne.s32.totalorder %s92, %s95
      %p104 = scmp.eq.s32.totalorder %s29, 1
      %p105 = por %p103, %p104
      %p106 = scmp.ne.s32.totalorder %s95, %s96
      %p107 = scmp.eq.s32.totalorder %s29, 0
      %p108 = por %p106, %p107
      %p109 = scmp.ne.s32.totalorder %s95, %s96
      %p110 = scmp.eq.s32.totalorder %s30, 1
      %p111 = por %p109, %p110
      %p113 = scmp.ne.s32.totalorder %s96, %s112
      %p114 = scmp.eq.s32.totalorder %s30, 0
      %p115 = por %p113, %p114
      %s116 = ssub.s32 %s32, %s53
      %s117 = ssub.s32 %s34, %s45
      %s118 = sor.u32 %s116, %s117
      %p119 = scmp.eq.s32.totalorder %s118, 0
      %s121 = sadd.s32 %s120, 1
      %s122 = scalar_select %p119, %s120, %s121
      %p125 = pneg %p119
      %p126 = scmp.eq.s32.totalorder %s24, 1
      %p127 = por %p125, %p126
      %p128 = scmp.ne.s32.totalorder %s120, %s123
      %p129 = scmp.eq.s32.totalorder %s24, 0
      %p130 = por %p128, %p129
      %p131 = scmp.ne.s32.totalorder %s120, %s123
      %p132 = scmp.eq.s32.totalorder %s29, 1
      %p133 = por %p131, %p132
      %p134 = scmp.ne.s32.totalorder %s123, %s124
      %p135 = scmp.eq.s32.totalorder %s29, 0
      %p136 = por %p134, %p135
      %p137 = scmp.ne.s32.totalorder %s123, %s124
      %p138 = scmp.eq.s32.totalorder %s30, 1
      %p139 = por %p137, %p138
      %p141 = scmp.ne.s32.totalorder %s124, %s140
      %p142 = scmp.eq.s32.totalorder %s30, 0
      %p143 = por %p141, %p142
      %s144 = ssub.s32 %s32, %s53
      %s145 = ssub.s32 %s34, %s45
      %s146 = sor.u32 %s144, %s145
      %p147 = scmp.eq.s32.totalorder %s146, 0
      %s149 = sadd.s32 %s148, 1
      %s150 = scalar_select %p147, %s148, %s149
      %p153 = pneg %p147
      %p154 = scmp.eq.s32.totalorder %s24, 1
      %p155 = por %p153, %p154
      %p156 = scmp.ne.s32.totalorder %s148, %s151
      %p157 = scmp.eq.s32.totalorder %s24, 0
      %p158 = por %p156, %p157
      %p159 = scmp.ne.s32.totalorder %s148, %s151
      %p160 = scmp.eq.s32.totalorder %s29, 1
      %p161 = por %p159, %p160
      %p162 = scmp.ne.s32.totalorder %s151, %s152
      %p163 = scmp.eq.s32.totalorder %s29, 0
      %p164 = por %p162, %p163
      %p165 = scmp.ne.s32.totalorder %s151, %s152
      %p166 = scmp.eq.s32.totalorder %s30, 1
      %p167 = por %p165, %p166
      %p169 = scmp.ne.s32.totalorder %s152, %s168
      %p170 = scmp.eq.s32.totalorder %s30, 0
      %p171 = por %p169, %p170
      %s172 = ssub.s32 %s31, %s57
      %s173 = ssub.s32 %s32, %s53
      %s174 = sor.u32 %s172, %s173
      %s175 = ssub.s32 %s33, %s49
      %s176 = sor.u32 %s174, %s175
      %p177 = scmp.eq.s32.totalorder %s176, 0
      %s179 = sadd.s32 %s178, 1
      %s180 = scalar_select %p177, %s178, %s179
      %p183 = pneg %p177
      %p184 = scmp.eq.s32.totalorder %s24, 1
      %p185 = por %p183, %p184
      %p186 = scmp.ne.s32.totalorder %s178, %s181
      %p187 = scmp.eq.s32.totalorder %s24, 0
      %p188 = por %p186, %p187
      %p189 = scmp.ne.s32.totalorder %s178, %s181
      %p190 = scmp.eq.s32.totalorder %s29, 1
      %p191 = por %p189, %p190
      %p192 = scmp.ne.s32.totalorder %s181, %s182
      %p193 = scmp.eq.s32.totalorder %s29, 0
      %p194 = por %p192, %p193
      %p195 = scmp.ne.s32.totalorder %s181, %s182
      %p196 = scmp.eq.s32.totalorder %s30, 1
      %p197 = por %p195, %p196
      %p199 = scmp.ne.s32.totalorder %s182, %s198
      %p200 = scmp.eq.s32.totalorder %s30, 0
      %p201 = por %p199, %p200
      %s202 = ssub.s32 %s31, %s57
      %s203 = ssub.s32 %s32, %s53
      %s204 = sor.u32 %s202, %s203
      %s205 = ssub.s32 %s33, %s49
      %s206 = sor.u32 %s204, %s205
      %p207 = scmp.eq.s32.totalorder %s206, 0
      %s209 = sadd.s32 %s208, 1
      %s210 = scalar_select %p207, %s208, %s209
      %p213 = pneg %p207
      %p214 = scmp.eq.s32.totalorder %s24, 1
      %p215 = por %p213, %p214
      %p216 = scmp.ne.s32.totalorder %s208, %s211
      %p217 = scmp.eq.s32.totalorder %s24, 0
      %p218 = por %p216, %p217
      %p219 = scmp.ne.s32.totalorder %s208, %s211
      %p220 = scmp.eq.s32.totalorder %s29, 1
      %p221 = por %p219, %p220
      %p222 = scmp.ne.s32.totalorder %s211, %s212
      %p223 = scmp.eq.s32.totalorder %s29, 0
      %p224 = por %p222, %p223
      %p225 = scmp.ne.s32.totalorder %s211, %s212
      %p226 = scmp.eq.s32.totalorder %s30, 1
      %p227 = por %p225, %p226
      %p229 = scmp.ne.s32.totalorder %s212, %s228
      %p230 = scmp.eq.s32.totalorder %s30, 0
      %p231 = por %p229, %p230
      %s232 = ssub.s32 %s31, %s57
      %s233 = ssub.s32 %s32, %s53
      %s234 = sor.u32 %s232, %s233
      %s235 = ssub.s32 %s33, %s49
      %s236 = sor.u32 %s234, %s235
      %p237 = scmp.eq.s32.totalorder %s236, 0
      %s239 = sadd.s32 %s238, 1
      %s240 = scalar_select %p237, %s238, %s239
      %p243 = pneg %p237
      %p244 = scmp.eq.s32.totalorder %s24, 1
      %p245 = por %p243, %p244
      %p246 = scmp.ne.s32.totalorder %s238, %s241
      %p247 = scmp.eq.s32.totalorder %s24, 0
      %p248 = por %p246, %p247
      %p249 = scmp.ne.s32.totalorder %s238, %s241
      %p250 = scmp.eq.s32.totalorder %s29, 1
      %p251 = por %p249, %p250
      %p252 = scmp.ne.s32.totalorder %s241, %s242
      %p253 = scmp.eq.s32.totalorder %s29, 0
      %p254 = por %p252, %p253
      %p255 = scmp.ne.s32.totalorder %s241, %s242
      %p256 = scmp.eq.s32.totalorder %s30, 1
      %p257 = por %p255, %p256
      %p259 = scmp.ne.s32.totalorder %s242, %s258
      %p260 = scmp.eq.s32.totalorder %s30, 0
      %p261 = por %p259, %p260
      %p262 = scmp.le.s32.totalorder 1, %s24
      %p263 = scmp.lt.s32.totalorder %s24, 3
      %p264 = pnand %p262, %p263
      %p265 = pneg %p264
      // Predicated region
      $region9: #{tpu_custom_call.1} parent=5 // pred_check
        _
      $region10: #{tpu_custom_call.1} parent=5 // pred_check_branch
        %267 = sbr.rel (%p264) target = $region12
      $region11: #{tpu_custom_call.1} parent=5 // pred_region
        %s268 = ssub.s32 %s24, 1
        // Predicated region
        $region13: #{tpu_custom_call.1} parent=11 // pred_check
          %p269 = pneg %p108
        $region14: #{tpu_custom_call.1} parent=11 // pred_check_branch
          %271 = sbr.rel (%p269) target = $region16
        $region15: #{tpu_custom_call.1} parent=11 // pred_region
          %s272 = smul.u32 2, %s36
          %s274 = ssub.s32 512, 512
          %275 = vsyncadd [#allocation9], %s274
          %s276 = smul.addr %s272, 2
          %s277 = sadd.s32 %s38, %s276
          %s278 = smul.addr %s277, 128
          %s279 = scalar_lea.hbm %s1, %s278
          %s280 = sshll.u32 [#allocation8], 4
          %s281 = int_to_ptr.vmem [resolvable:$true] %s280
          %286 = dma.hbm_to_vmem [thread:$0]  %s279, 512, %s281, [#allocation9], 128, 128, 8
        $region16: #{tpu_custom_call.1} parent=11 // pred_fallthru
          _
        // Predicated region
        $region17: #{tpu_custom_call.1} parent=11 // pred_check
          %p287 = pneg %p136
        $region18: #{tpu_custom_call.1} parent=11 // pred_check_branch
          %289 = sbr.rel (%p287) target = $region20
        $region19: #{tpu_custom_call.1} parent=11 // pred_region
          %s290 = smul.u32 2, %s36
          %s292 = ssub.s32 512, 512
          %293 = vsyncadd [#allocation9], %s292
          %s294 = smul.addr %s290, 2
          %s295 = sadd.s32 %s38, %s294
          %s296 = smul.addr %s295, 128
          %s297 = scalar_lea.hbm %s2, %s296
          %s298 = sshll.u32 [#allocation10], 4
          %s299 = int_to_ptr.vmem [resolvable:$true] %s298
          %304 = dma.hbm_to_vmem [thread:$0]  %s297, 512, %s299, [#allocation9], 128, 128, 8
        $region20: #{tpu_custom_call.1} parent=11 // pred_fallthru
          _
        // Predicated region
        $region21: #{tpu_custom_call.1} parent=11 // pred_check
          %p305 = pneg %p164
        $region22: #{tpu_custom_call.1} parent=11 // pred_check_branch
          %307 = sbr.rel (%p305) target = $region24
        $region23: #{tpu_custom_call.1} parent=11 // pred_region
          %s308 = smul.u32 2, %s36
          %s310 = ssub.s32 512, 512
          %311 = vsyncadd [#allocation12], %s310
          %s312 = smul.addr %s308, 2
          %s313 = sadd.s32 %s38, %s312
          %s314 = smul.addr %s313, 128
          %s315 = scalar_lea.hbm %s3, %s314
          %s316 = sshll.u32 [#allocation11], 4
          %s317 = int_to_ptr.vmem [resolvable:$true] %s316
          %322 = dma.hbm_to_vmem [thread:$0]  %s315, 512, %s317, [#allocation12], 128, 128, 8
        $region24: #{tpu_custom_call.1} parent=11 // pred_fallthru
          _
      $region12: #{tpu_custom_call.1} parent=5 // pred_fallthru
        _
      %p323 = scmp.lt.s32.totalorder %s24, 2
      // Predicated region
      $region25: #{tpu_custom_call.1} parent=5 // pred_check
        %p324 = pneg %p323
      $region26: #{tpu_custom_call.1} parent=5 // pred_check_branch
        %326 = sbr.rel (%p324) target = $region28
      $region27: #{tpu_custom_call.1} parent=5 // pred_region
        // Predicated region
        $region29: #{tpu_custom_call.1} parent=27 // pred_check
          %p327 = pneg %p74
        $region30: #{tpu_custom_call.1} parent=27 // pred_check_branch
          %329 = sbr.rel (%p327) target = $region32
        $region31: #{tpu_custom_call.1} parent=27 // pred_region
          %s330 = sand.u32 %s64, 1
          %s331 = scalar_lea.sflag [#allocation6], %s330
          %s332 = sand.u32 %s64, 1
          %s333 = smul.addr %s332, 8
          %s334 = scalar_lea.vmem [#allocation5], %s333
          %s336 = ssub.s32 128, 128
          %337 = vsyncadd %s331, %s336
          %s338 = sadd.s32 %s34, %s33
          %s339 = sadd.s32 %s338, %s31
          %s340 = smul.addr %s339, 128
          %s341 = scalar_lea.hbm %s0, %s340
          %s343 = sshll.u32 %s334, 4
          %s344 = int_to_ptr.vmem [resolvable:$true] %s343
          %346 = dma.hbm_to_vmem [thread:$0]  %s341, 128, %s344, %s331
        $region32: #{tpu_custom_call.1} parent=27 // pred_fallthru
          _
      $region28: #{tpu_custom_call.1} parent=5 // pred_fallthru
        _
      %p347 = scmp.le.s32.totalorder 1, %s24
      %p348 = scmp.lt.s32.totalorder %s24, 3
      %p349 = pnand %p347, %p348
      %p350 = pneg %p349
      // Predicated region
      $region33: #{tpu_custom_call.1} parent=5 // pred_check
        _
      $region34: #{tpu_custom_call.1} parent=5 // pred_check_branch
        %352 = sbr.rel (%p349) target = $region36
      $region35: #{tpu_custom_call.1} parent=5 // pred_region
        %s353 = ssub.s32 %s24, 1
        %s354 = sand.u32 %s67, 1
        %s355 = scalar_lea.sflag [#allocation6], %s354
        %s356 = sand.u32 %s67, 1
        %s357 = smul.addr %s356, 8
        %s358 = scalar_lea.vmem [#allocation5], %s357
        // Predicated region
        $region37: #{tpu_custom_call.1} parent=35 // pred_check
          %p359 = pneg %p80
        $region38: #{tpu_custom_call.1} parent=35 // pred_check_branch
          %361 = sbr.rel (%p359) target = $region40
        $region39: #{tpu_custom_call.1} parent=35 // pred_region
          %362 = dma.done %s355, 128
        $region40: #{tpu_custom_call.1} parent=35 // pred_fallthru
          _
        // Predicated region
        $region41: #{tpu_custom_call.1} parent=35 // pred_check
          %p363 = pneg %p108
        $region42: #{tpu_custom_call.1} parent=35 // pred_check_branch
          %365 = sbr.rel (%p363) target = $region44
        $region43: #{tpu_custom_call.1} parent=35 // pred_region
          %366 = dma.done [#allocation9], 512
        $region44: #{tpu_custom_call.1} parent=35 // pred_fallthru
          _
        // Predicated region
        $region45: #{tpu_custom_call.1} parent=35 // pred_check
          %p367 = pneg %p136
        $region46: #{tpu_custom_call.1} parent=35 // pred_check_branch
          %369 = sbr.rel (%p367) target = $region48
        $region47: #{tpu_custom_call.1} parent=35 // pred_region
          %370 = dma.done [#allocation9], 512
        $region48: #{tpu_custom_call.1} parent=35 // pred_fallthru
          _
        // Predicated region
        $region49: #{tpu_custom_call.1} parent=35 // pred_check
          %p371 = pneg %p164
        $region50: #{tpu_custom_call.1} parent=35 // pred_check_branch
          %373 = sbr.rel (%p371) target = $region52
        $region51: #{tpu_custom_call.1} parent=35 // pred_region
          %374 = dma.done [#allocation12], 512
        $region52: #{tpu_custom_call.1} parent=35 // pred_fallthru
          _
        %s375 = sand.u32 %s67, 1
        %s376 = scalar_lea.sflag [#allocation6], %s375
        %s377 = sand.u32 %s67, 1
        %s378 = smul.addr %s377, 8
        %s379 = scalar_lea.vmem [#allocation5], %s378
        %p380 = pneg %p80
        %p381 = pneg %p77
        %p382 = pneg %p108
        %p383 = pneg %p105
        %p384 = pneg %p136
        %p385 = pneg %p133
        %p386 = pneg %p164
        %p387 = pneg %p161
        %p388 = pneg %p194
        %p389 = pneg %p191
        %s390 = sand.u32 %s181, 1
        %s391 = scalar_lea.sflag [#allocation7], %s390
        %s392 = sand.u32 %s181, 1
        %s393 = smul.addr %s392, 16
        %s394 = scalar_lea.vmem [#allocation13], %s393
        %p395 = pneg %p224
        %p396 = pneg %p221
        %s397 = sand.u32 %s29, 1
        %s398 = scalar_lea.sflag [#allocation15], %s397
        %s399 = sand.u32 %s211, 1
        %s400 = smul.addr %s399, 16
        %s401 = scalar_lea.vmem [#allocation14], %s400
        %p402 = pneg %p254
        %p403 = pneg %p251
        %s404 = sand.u32 %s29, 1
        %s405 = scalar_lea.sflag [#allocation15], %s404
        %s406 = sand.u32 %s241, 1
        %s407 = smul.addr %s406, 16
        %s408 = scalar_lea.vmem [#allocation16], %s407
        %s409 = smul.u32 2, %s36
        %s410 = smul.u32 2, %s36
        %s411 = smul.u32 2, %s36
        %s412 = smul.u32 2, %s36
        %s413 = smul.u32 2, %s36
        %s414 = smul.u32 2, %s36
        %p415 = scmp.eq.s32.totalorder %s38, 0
        // Predicated region
        $region53: #{tpu_custom_call.1} parent=35 // pred_check
          %p416 = pneg %p415
        $region54: #{tpu_custom_call.1} parent=35 // pred_check_branch
          %418 = sbr.rel (%p416) target = $region56
        $region55: #{tpu_custom_call.1} parent=35 // pred_region
          %vm419 = vcmask 130048
          %420 = vst.msk [vmem:[#allocation2] sm:$0xff] %vm419, 0.0
          %421 = vst.msk [vmem:[#allocation2 + $0x8] sm:$0xff] %vm419, 0.0
          %422 = vst.msk [vmem:[#allocation3] sm:$0xff] %vm419, 0.0
          %423 = vst.msk [vmem:[#allocation3 + $0x8] sm:$0xff] %vm419, 0.0
          %424 = vst.msk [vmem:[#allocation4] sm:$0xff] %vm419, 0.0
          %425 = vst.msk [vmem:[#allocation4 + $0x8] sm:$0xff] %vm419, 0.0
        $region56: #{tpu_custom_call.1} parent=35 // pred_fallthru
          _
        %v426 = vld [vmem:[%s358] sm:$0xff]
        %v427 = vld [vmem:[#allocation2] sm:$0xff]
        %v428 = vld [vmem:[#allocation8] sm:$0xff]
        %v429 = vld [vmem:[#allocation8 + $0x8] sm:$0xff]
        %vm430 = vcmask 261120
        %v432 = vsel %vm430, %v426, 0
        %v435 = vsel %vm430, %v428, 0
        %v438 = vsel %vm430, %v429, 0
        %440 = vmatprep.subr.mxu0 0.0
        %441 = vmatpush1.xpose.msra.mxu0 %v435
        %442 = vmatprep.subr.mxu0 0.0
        %443 = vmatpush1.xpose.msra.mxu0 %v438
        %444 = vmatprep.subr.mxu0 0.0
        %445 = vmatpush1.xpose.msra.mxu0 0.0
        %446 = vmatprep.subr.mxu0 0.0
        %447 = vmatpush1.xpose.msra.mxu0 0.0
        %448 = vmatprep.subr.mxu0 0.0
        %449 = vmatpush1.xpose.msra.mxu0 0.0
        %450 = vmatprep.subr.mxu0 0.0
        %451 = vmatpush1.xpose.msra.mxu0 0.0
        %452 = vmatprep.subr.mxu0 0.0
        %453 = vmatpush1.xpose.msra.mxu0 0.0
        %454 = vmatprep.subr.mxu0 0.0
        %455 = vmatpush1.xpose.msra.mxu0 0.0
        %456 = vmatprep.subr.mxu0 0.0
        %457 = vmatpush1.xpose.msra.mxu0 0.0
        %458 = vmatprep.subr.mxu0 0.0
        %459 = vmatpush1.xpose.msra.mxu0 0.0
        %460 = vmatprep.subr.mxu0 0.0
        %461 = vmatpush1.xpose.msra.mxu0 0.0
        %462 = vmatprep.subr.mxu0 0.0
        %463 = vmatpush1.xpose.msra.mxu0 0.0
        %464 = vmatprep.subr.mxu0 0.0
        %465 = vmatpush1.xpose.msra.mxu0 0.0
        %466 = vmatprep.subr.mxu0 0.0
        %467 = vmatpush1.xpose.msra.mxu0 0.0
        %468 = vmatprep.subr.mxu0 0.0
        %469 = vmatpush1.xpose.msra.mxu0 0.0
        %470 = vmatprep.subr.mxu0 0.0
        %471 = vmatpush1.xpose.msra.mxu0 0.0
        %472 = vmatprep.subr.mxu0 0.0
        %473 = vmatpush1.xpose.msra.mxu0 0.0
        %474 = vmatprep.subr.mxu0 0.0
        %475 = vmatpush1.xpose.msra.mxu0 0.0
        %476 = vmatprep.subr.mxu0 0.0
        %477 = vmatpush1.xpose.msra.mxu0 0.0
        %478 = vmatprep.subr.mxu0 0.0
        %479 = vmatpush1.xpose.msra.mxu0 0.0
        %480 = vmatprep.subr.mxu0 0.0
        %481 = vmatpush1.xpose.msra.mxu0 0.0
        %482 = vmatprep.subr.mxu0 0.0
        %483 = vmatpush1.xpose.msra.mxu0 0.0
        %484 = vmatprep.subr.mxu0 0.0
        %485 = vmatpush1.xpose.msra.mxu0 0.0
        %486 = vmatprep.subr.mxu0 0.0
        %487 = vmatpush1.xpose.msra.mxu0 0.0
        %488 = vmatprep.subr.mxu0 0.0
        %489 = vmatpush1.xpose.msra.mxu0 0.0
        %490 = vmatprep.subr.mxu0 0.0
        %491 = vmatpush1.xpose.msra.mxu0 0.0
        %492 = vmatprep.subr.mxu0 0.0
        %493 = vmatpush1.xpose.msra.mxu0 0.0
        %494 = vmatprep.subr.mxu0 0.0
        %495 = vmatpush1.xpose.msra.mxu0 0.0
        %496 = vmatprep.subr.mxu0 0.0
        %497 = vmatpush1.xpose.msra.mxu0 0.0
        %498 = vmatprep.subr.mxu0 0.0
        %499 = vmatpush1.xpose.msra.mxu0 0.0
        %500 = vmatprep.subr.mxu0 0.0
        %501 = vmatpush1.xpose.msra.mxu0 0.0
        %502 = vmatprep.subr.mxu0 0.0
        %503 = vmatpush1.xpose.msra.mxu0 0.0
        %504 = vmatprep.mubr.f32.mxu0 0.0
        %505 = vmatmul.mubr.f32.gmra.mrb[0].mxu0 %v432
        %v506 = vpop.f32.mrb[0].mxu0
        %v507 = vadd.f32 0.0, %v506
        %v508 = vpop.f32.mrb[0].mxu0
        %509 = vdwg.mxu0
        %v510 = vadd.f32 %v427, %v507
        %vm511 = vcmask 130048
        %512 = vst.msk [vmem:[#allocation2] sm:$0xff] %vm511, %v510
        %v513 = vld [vmem:[#allocation3] sm:$0xff]
        %v514 = vld [vmem:[#allocation10] sm:$0xff]
        %v515 = vld [vmem:[#allocation10 + $0x8] sm:$0xff]
        %v517 = vsel %vm430, %v514, 0
        %v520 = vsel %vm430, %v515, 0
        %522 = vmatprep.subr.mxu0 0.0
        %523 = vmatpush1.xpose.msra.mxu0 %v517
        %524 = vmatprep.subr.mxu0 0.0
        %525 = vmatpush1.xpose.msra.mxu0 %v520
        %526 = vmatprep.subr.mxu0 0.0
        %527 = vmatpush1.xpose.msra.mxu0 0.0
        %528 = vmatprep.subr.mxu0 0.0
        %529 = vmatpush1.xpose.msra.mxu0 0.0
        %530 = vmatprep.subr.mxu0 0.0
        %531 = vmatpush1.xpose.msra.mxu0 0.0
        %532 = vmatprep.subr.mxu0 0.0
        %533 = vmatpush1.xpose.msra.mxu0 0.0
        %534 = vmatprep.subr.mxu0 0.0
        %535 = vmatpush1.xpose.msra.mxu0 0.0
        %536 = vmatprep.subr.mxu0 0.0
        %537 = vmatpush1.xpose.msra.mxu0 0.0
        %538 = vmatprep.subr.mxu0 0.0
        %539 = vmatpush1.xpose.msra.mxu0 0.0
        %540 = vmatprep.subr.mxu0 0.0
        %541 = vmatpush1.xpose.msra.mxu0 0.0
        %542 = vmatprep.subr.mxu0 0.0
        %543 = vmatpush1.xpose.msra.mxu0 0.0
        %544 = vmatprep.subr.mxu0 0.0
        %545 = vmatpush1.xpose.msra.mxu0 0.0
        %546 = vmatprep.subr.mxu0 0.0
        %547 = vmatpush1.xpose.msra.mxu0 0.0
        %548 = vmatprep.subr.mxu0 0.0
        %549 = vmatpush1.xpose.msra.mxu0 0.0
        %550 = vmatprep.subr.mxu0 0.0
        %551 = vmatpush1.xpose.msra.mxu0 0.0
        %552 = vmatprep.subr.mxu0 0.0
        %553 = vmatpush1.xpose.msra.mxu0 0.0
        %554 = vmatprep.subr.mxu0 0.0
        %555 = vmatpush1.xpose.msra.mxu0 0.0
        %556 = vmatprep.subr.mxu0 0.0
        %557 = vmatpush1.xpose.msra.mxu0 0.0
        %558 = vmatprep.subr.mxu0 0.0
        %559 = vmatpush1.xpose.msra.mxu0 0.0
        %560 = vmatprep.subr.mxu0 0.0
        %561 = vmatpush1.xpose.msra.mxu0 0.0
        %562 = vmatprep.subr.mxu0 0.0
        %563 = vmatpush1.xpose.msra.mxu0 0.0
        %564 = vmatprep.subr.mxu0 0.0
        %565 = vmatpush1.xpose.msra.mxu0 0.0
        %566 = vmatprep.subr.mxu0 0.0
        %567 = vmatpush1.xpose.msra.mxu0 0.0
        %568 = vmatprep.subr.mxu0 0.0
        %569 = vmatpush1.xpose.msra.mxu0 0.0
        %570 = vmatprep.subr.mxu0 0.0
        %571 = vmatpush1.xpose.msra.mxu0 0.0
        %572 = vmatprep.subr.mxu0 0.0
        %573 = vmatpush1.xpose.msra.mxu0 0.0
        %574 = vmatprep.subr.mxu0 0.0
        %575 = vmatpush1.xpose.msra.mxu0 0.0
        %576 = vmatprep.subr.mxu0 0.0
        %577 = vmatpush1.xpose.msra.mxu0 0.0
        %578 = vmatprep.subr.mxu0 0.0
        %579 = vmatpush1.xpose.msra.mxu0 0.0
        %580 = vmatprep.subr.mxu0 0.0
        %581 = vmatpush1.xpose.msra.mxu0 0.0
        %582 = vmatprep.subr.mxu0 0.0
        %583 = vmatpush1.xpose.msra.mxu0 0.0
        %584 = vmatprep.subr.mxu0 0.0
        %585 = vmatpush1.xpose.msra.mxu0 0.0
        %586 = vmatprep.mubr.f32.mxu0 0.0
        %587 = vmatmul.mubr.f32.gmra.mrb[0].mxu0 %v432
        %v588 = vpop.f32.mrb[0].mxu0
        %v589 = vadd.f32 0.0, %v588
        %v590 = vpop.f32.mrb[0].mxu0
        %591 = vdwg.mxu0
        %v592 = vadd.f32 %v513, %v589
        %593 = vst.msk [vmem:[#allocation3] sm:$0xff] %vm511, %v592
        %v594 = vld [vmem:[#allocation4] sm:$0xff]
        %v595 = vld [vmem:[#allocation11] sm:$0xff]
        %v596 = vld [vmem:[#allocation11 + $0x8] sm:$0xff]
        %v598 = vsel %vm430, %v595, 0
        %v601 = vsel %vm430, %v596, 0
        %603 = vmatprep.subr.mxu0 0.0
        %604 = vmatpush1.xpose.msra.mxu0 %v598
        %605 = vmatprep.subr.mxu0 0.0
        %606 = vmatpush1.xpose.msra.mxu0 %v601
        %607 = vmatprep.subr.mxu0 0.0
        %608 = vmatpush1.xpose.msra.mxu0 0.0
        %609 = vmatprep.subr.mxu0 0.0
        %610 = vmatpush1.xpose.msra.mxu0 0.0
        %611 = vmatprep.subr.mxu0 0.0
        %612 = vmatpush1.xpose.msra.mxu0 0.0
        %613 = vmatprep.subr.mxu0 0.0
        %614 = vmatpush1.xpose.msra.mxu0 0.0
        %615 = vmatprep.subr.mxu0 0.0
        %616 = vmatpush1.xpose.msra.mxu0 0.0
        %617 = vmatprep.subr.mxu0 0.0
        %618 = vmatpush1.xpose.msra.mxu0 0.0
        %619 = vmatprep.subr.mxu0 0.0
        %620 = vmatpush1.xpose.msra.mxu0 0.0
        %621 = vmatprep.subr.mxu0 0.0
        %622 = vmatpush1.xpose.msra.mxu0 0.0
        %623 = vmatprep.subr.mxu0 0.0
        %624 = vmatpush1.xpose.msra.mxu0 0.0
        %625 = vmatprep.subr.mxu0 0.0
        %626 = vmatpush1.xpose.msra.mxu0 0.0
        %627 = vmatprep.subr.mxu0 0.0
        %628 = vmatpush1.xpose.msra.mxu0 0.0
        %629 = vmatprep.subr.mxu0 0.0
        %630 = vmatpush1.xpose.msra.mxu0 0.0
        %631 = vmatprep.subr.mxu0 0.0
        %632 = vmatpush1.xpose.msra.mxu0 0.0
        %633 = vmatprep.subr.mxu0 0.0
        %634 = vmatpush1.xpose.msra.mxu0 0.0
        %635 = vmatprep.subr.mxu0 0.0
        %636 = vmatpush1.xpose.msra.mxu0 0.0
        %637 = vmatprep.subr.mxu0 0.0
        %638 = vmatpush1.xpose.msra.mxu0 0.0
        %639 = vmatprep.subr.mxu0 0.0
        %640 = vmatpush1.xpose.msra.mxu0 0.0
        %641 = vmatprep.subr.mxu0 0.0
        %642 = vmatpush1.xpose.msra.mxu0 0.0
        %643 = vmatprep.subr.mxu0 0.0
        %644 = vmatpush1.xpose.msra.mxu0 0.0
        %645 = vmatprep.subr.mxu0 0.0
        %646 = vmatpush1.xpose.msra.mxu0 0.0
        %647 = vmatprep.subr.mxu0 0.0
        %648 = vmatpush1.xpose.msra.mxu0 0.0
        %649 = vmatprep.subr.mxu0 0.0
        %650 = vmatpush1.xpose.msra.mxu0 0.0
        %651 = vmatprep.subr.mxu0 0.0
        %652 = vmatpush1.xpose.msra.mxu0 0.0
        %653 = vmatprep.subr.mxu0 0.0
        %654 = vmatpush1.xpose.msra.mxu0 0.0
        %655 = vmatprep.subr.mxu0 0.0
        %656 = vmatpush1.xpose.msra.mxu0 0.0
        %657 = vmatprep.subr.mxu0 0.0
        %658 = vmatpush1.xpose.msra.mxu0 0.0
        %659 = vmatprep.subr.mxu0 0.0
        %660 = vmatpush1.xpose.msra.mxu0 0.0
        %661 = vmatprep.subr.mxu0 0.0
        %662 = vmatpush1.xpose.msra.mxu0 0.0
        %663 = vmatprep.subr.mxu0 0.0
        %664 = vmatpush1.xpose.msra.mxu0 0.0
        %665 = vmatprep.subr.mxu0 0.0
        %666 = vmatpush1.xpose.msra.mxu0 0.0
        %667 = vmatprep.mubr.f32.mxu0 0.0
        %668 = vmatmul.mubr.f32.gmra.mrb[0].mxu0 %v432
        %v669 = vpop.f32.mrb[0].mxu0
        %v670 = vadd.f32 0.0, %v669
        %v671 = vpop.f32.mrb[0].mxu0
        %672 = vdwg.mxu0
        %v673 = vadd.f32 %v594, %v670
        %674 = vst.msk [vmem:[#allocation4] sm:$0xff] %vm511, %v673
        %s675 = scalar_lea.vmem [#allocation2], 8
        %v676 = vld [vmem:[%s675] sm:$0xff]
        %s677 = scalar_lea.vmem [#allocation8], 16
        %v678 = vld [vmem:[%s677] sm:$0xff]
        %v679 = vld [vmem:[%s677 + $0x8] sm:$0xff]
        %v681 = vsel %vm430, %v678, 0
        %v684 = vsel %vm430, %v679, 0
        %686 = vmatprep.subr.mxu0 0.0
        %687 = vmatpush1.xpose.msra.mxu0 %v681
        %688 = vmatprep.subr.mxu0 0.0
        %689 = vmatpush1.xpose.msra.mxu0 %v684
        %690 = vmatprep.subr.mxu0 0.0
        %691 = vmatpush1.xpose.msra.mxu0 0.0
        %692 = vmatprep.subr.mxu0 0.0
        %693 = vmatpush1.xpose.msra.mxu0 0.0
        %694 = vmatprep.subr.mxu0 0.0
        %695 = vmatpush1.xpose.msra.mxu0 0.0
        %696 = vmatprep.subr.mxu0 0.0
        %697 = vmatpush1.xpose.msra.mxu0 0.0
        %698 = vmatprep.subr.mxu0 0.0
        %699 = vmatpush1.xpose.msra.mxu0 0.0
        %700 = vmatprep.subr.mxu0 0.0
        %701 = vmatpush1.xpose.msra.mxu0 0.0
        %702 = vmatprep.subr.mxu0 0.0
        %703 = vmatpush1.xpose.msra.mxu0 0.0
        %704 = vmatprep.subr.mxu0 0.0
        %705 = vmatpush1.xpose.msra.mxu0 0.0
        %706 = vmatprep.subr.mxu0 0.0
        %707 = vmatpush1.xpose.msra.mxu0 0.0
        %708 = vmatprep.subr.mxu0 0.0
        %709 = vmatpush1.xpose.msra.mxu0 0.0
        %710 = vmatprep.subr.mxu0 0.0
        %711 = vmatpush1.xpose.msra.mxu0 0.0
        %712 = vmatprep.subr.mxu0 0.0
        %713 = vmatpush1.xpose.msra.mxu0 0.0
        %714 = vmatprep.subr.mxu0 0.0
        %715 = vmatpush1.xpose.msra.mxu0 0.0
        %716 = vmatprep.subr.mxu0 0.0
        %717 = vmatpush1.xpose.msra.mxu0 0.0
        %718 = vmatprep.subr.mxu0 0.0
        %719 = vmatpush1.xpose.msra.mxu0 0.0
        %720 = vmatprep.subr.mxu0 0.0
        %721 = vmatpush1.xpose.msra.mxu0 0.0
        %722 = vmatprep.subr.mxu0 0.0
        %723 = vmatpush1.xpose.msra.mxu0 0.0
        %724 = vmatprep.subr.mxu0 0.0
        %725 = vmatpush1.xpose.msra.mxu0 0.0
        %726 = vmatprep.subr.mxu0 0.0
        %727 = vmatpush1.xpose.msra.mxu0 0.0
        %728 = vmatprep.subr.mxu0 0.0
        %729 = vmatpush1.xpose.msra.mxu0 0.0
        %730 = vmatprep.subr.mxu0 0.0
        %731 = vmatpush1.xpose.msra.mxu0 0.0
        %732 = vmatprep.subr.mxu0 0.0
        %733 = vmatpush1.xpose.msra.mxu0 0.0
        %734 = vmatprep.subr.mxu0 0.0
        %735 = vmatpush1.xpose.msra.mxu0 0.0
        %736 = vmatprep.subr.mxu0 0.0
        %737 = vmatpush1.xpose.msra.mxu0 0.0
        %738 = vmatprep.subr.mxu0 0.0
        %739 = vmatpush1.xpose.msra.mxu0 0.0
        %740 = vmatprep.subr.mxu0 0.0
        %741 = vmatpush1.xpose.msra.mxu0 0.0
        %742 = vmatprep.subr.mxu0 0.0
        %743 = vmatpush1.xpose.msra.mxu0 0.0
        %744 = vmatprep.subr.mxu0 0.0
        %745 = vmatpush1.xpose.msra.mxu0 0.0
        %746 = vmatprep.subr.mxu0 0.0
        %747 = vmatpush1.xpose.msra.mxu0 0.0
        %748 = vmatprep.subr.mxu0 0.0
        %749 = vmatpush1.xpose.msra.mxu0 0.0
        %750 = vmatprep.mubr.f32.mxu0 0.0
        %751 = vmatmul.mubr.f32.gmra.mrb[0].mxu0 %v432
        %v752 = vpop.f32.mrb[0].mxu0
        %v753 = vadd.f32 0.0, %v752
        %v754 = vpop.f32.mrb[0].mxu0
        %755 = vdwg.mxu0
        %v756 = vadd.f32 %v676, %v753
        %757 = vst.msk [vmem:[%s675] sm:$0xff] %vm511, %v756
        %s758 = scalar_lea.vmem [#allocation3], 8
        %v759 = vld [vmem:[%s758] sm:$0xff]
        %s760 = scalar_lea.vmem [#allocation10], 16
        %v761 = vld [vmem:[%s760] sm:$0xff]
        %v762 = vld [vmem:[%s760 + $0x8] sm:$0xff]
        %v764 = vsel %vm430, %v761, 0
        %v767 = vsel %vm430, %v762, 0
        %769 = vmatprep.subr.mxu0 0.0
        %770 = vmatpush1.xpose.msra.mxu0 %v764
        %771 = vmatprep.subr.mxu0 0.0
        %772 = vmatpush1.xpose.msra.mxu0 %v767
        %773 = vmatprep.subr.mxu0 0.0
        %774 = vmatpush1.xpose.msra.mxu0 0.0
        %775 = vmatprep.subr.mxu0 0.0
        %776 = vmatpush1.xpose.msra.mxu0 0.0
        %777 = vmatprep.subr.mxu0 0.0
        %778 = vmatpush1.xpose.msra.mxu0 0.0
        %779 = vmatprep.subr.mxu0 0.0
        %780 = vmatpush1.xpose.msra.mxu0 0.0
        %781 = vmatprep.subr.mxu0 0.0
        %782 = vmatpush1.xpose.msra.mxu0 0.0
        %783 = vmatprep.subr.mxu0 0.0
        %784 = vmatpush1.xpose.msra.mxu0 0.0
        %785 = vmatprep.subr.mxu0 0.0
        %786 = vmatpush1.xpose.msra.mxu0 0.0
        %787 = vmatprep.subr.mxu0 0.0
        %788 = vmatpush1.xpose.msra.mxu0 0.0
        %789 = vmatprep.subr.mxu0 0.0
        %790 = vmatpush1.xpose.msra.mxu0 0.0
        %791 = vmatprep.subr.mxu0 0.0
        %792 = vmatpush1.xpose.msra.mxu0 0.0
        %793 = vmatprep.subr.mxu0 0.0
        %794 = vmatpush1.xpose.msra.mxu0 0.0
        %795 = vmatprep.subr.mxu0 0.0
        %796 = vmatpush1.xpose.msra.mxu0 0.0
        %797 = vmatprep.subr.mxu0 0.0
        %798 = vmatpush1.xpose.msra.mxu0 0.0
        %799 = vmatprep.subr.mxu0 0.0
        %800 = vmatpush1.xpose.msra.mxu0 0.0
        %801 = vmatprep.subr.mxu0 0.0
        %802 = vmatpush1.xpose.msra.mxu0 0.0
        %803 = vmatprep.subr.mxu0 0.0
        %804 = vmatpush1.xpose.msra.mxu0 0.0
        %805 = vmatprep.subr.mxu0 0.0
        %806 = vmatpush1.xpose.msra.mxu0 0.0
        %807 = vmatprep.subr.mxu0 0.0
        %808 = vmatpush1.xpose.msra.mxu0 0.0
        %809 = vmatprep.subr.mxu0 0.0
        %810 = vmatpush1.xpose.msra.mxu0 0.0
        %811 = vmatprep.subr.mxu0 0.0
        %812 = vmatpush1.xpose.msra.mxu0 0.0
        %813 = vmatprep.subr.mxu0 0.0
        %814 = vmatpush1.xpose.msra.mxu0 0.0
        %815 = vmatprep.subr.mxu0 0.0
        %816 = vmatpush1.xpose.msra.mxu0 0.0
        %817 = vmatprep.subr.mxu0 0.0
        %818 = vmatpush1.xpose.msra.mxu0 0.0
        %819 = vmatprep.subr.mxu0 0.0
        %820 = vmatpush1.xpose.msra.mxu0 0.0
        %821 = vmatprep.subr.mxu0 0.0
        %822 = vmatpush1.xpose.msra.mxu0 0.0
        %823 = vmatprep.subr.mxu0 0.0
        %824 = vmatpush1.xpose.msra.mxu0 0.0
        %825 = vmatprep.subr.mxu0 0.0
        %826 = vmatpush1.xpose.msra.mxu0 0.0
        %827 = vmatprep.subr.mxu0 0.0
        %828 = vmatpush1.xpose.msra.mxu0 0.0
        %829 = vmatprep.subr.mxu0 0.0
        %830 = vmatpush1.xpose.msra.mxu0 0.0
        %831 = vmatprep.subr.mxu0 0.0
        %832 = vmatpush1.xpose.msra.mxu0 0.0
        %833 = vmatprep.mubr.f32.mxu0 0.0
        %834 = vmatmul.mubr.f32.gmra.mrb[0].mxu0 %v432
        %v835 = vpop.f32.mrb[0].mxu0
        %v836 = vadd.f32 0.0, %v835
        %v837 = vpop.f32.mrb[0].mxu0
        %838 = vdwg.mxu0
        %v839 = vadd.f32 %v759, %v836
        %840 = vst.msk [vmem:[%s758] sm:$0xff] %vm511, %v839
        %s841 = scalar_lea.vmem [#allocation4], 8
        %v842 = vld [vmem:[%s841] sm:$0xff]
        %s843 = scalar_lea.vmem [#allocation11], 16
        %v844 = vld [vmem:[%s843] sm:$0xff]
        %v845 = vld [vmem:[%s843 + $0x8] sm:$0xff]
        %v847 = vsel %vm430, %v844, 0
        %v850 = vsel %vm430, %v845, 0
        %852 = vmatprep.subr.mxu0 0.0
        %853 = vmatpush1.xpose.msra.mxu0 %v847
        %854 = vmatprep.subr.mxu0 0.0
        %855 = vmatpush1.xpose.msra.mxu0 %v850
        %856 = vmatprep.subr.mxu0 0.0
        %857 = vmatpush1.xpose.msra.mxu0 0.0
        %858 = vmatprep.subr.mxu0 0.0
        %859 = vmatpush1.xpose.msra.mxu0 0.0
        %860 = vmatprep.subr.mxu0 0.0
        %861 = vmatpush1.xpose.msra.mxu0 0.0
        %862 = vmatprep.subr.mxu0 0.0
        %863 = vmatpush1.xpose.msra.mxu0 0.0
        %864 = vmatprep.subr.mxu0 0.0
        %865 = vmatpush1.xpose.msra.mxu0 0.0
        %866 = vmatprep.subr.mxu0 0.0
        %867 = vmatpush1.xpose.msra.mxu0 0.0
        %868 = vmatprep.subr.mxu0 0.0
        %869 = vmatpush1.xpose.msra.mxu0 0.0
        %870 = vmatprep.subr.mxu0 0.0
        %871 = vmatpush1.xpose.msra.mxu0 0.0
        %872 = vmatprep.subr.mxu0 0.0
        %873 = vmatpush1.xpose.msra.mxu0 0.0
        %874 = vmatprep.subr.mxu0 0.0
        %875 = vmatpush1.xpose.msra.mxu0 0.0
        %876 = vmatprep.subr.mxu0 0.0
        %877 = vmatpush1.xpose.msra.mxu0 0.0
        %878 = vmatprep.subr.mxu0 0.0
        %879 = vmatpush1.xpose.msra.mxu0 0.0
        %880 = vmatprep.subr.mxu0 0.0
        %881 = vmatpush1.xpose.msra.mxu0 0.0
        %882 = vmatprep.subr.mxu0 0.0
        %883 = vmatpush1.xpose.msra.mxu0 0.0
        %884 = vmatprep.subr.mxu0 0.0
        %885 = vmatpush1.xpose.msra.mxu0 0.0
        %886 = vmatprep.subr.mxu0 0.0
        %887 = vmatpush1.xpose.msra.mxu0 0.0
        %888 = vmatprep.subr.mxu0 0.0
        %889 = vmatpush1.xpose.msra.mxu0 0.0
        %890 = vmatprep.subr.mxu0 0.0
        %891 = vmatpush1.xpose.msra.mxu0 0.0
        %892 = vmatprep.subr.mxu0 0.0
        %893 = vmatpush1.xpose.msra.mxu0 0.0
        %894 = vmatprep.subr.mxu0 0.0
        %895 = vmatpush1.xpose.msra.mxu0 0.0
        %896 = vmatprep.subr.mxu0 0.0
        %897 = vmatpush1.xpose.msra.mxu0 0.0
        %898 = vmatprep.subr.mxu0 0.0
        %899 = vmatpush1.xpose.msra.mxu0 0.0
        %900 = vmatprep.subr.mxu0 0.0
        %901 = vmatpush1.xpose.msra.mxu0 0.0
        %902 = vmatprep.subr.mxu0 0.0
        %903 = vmatpush1.xpose.msra.mxu0 0.0
        %904 = vmatprep.subr.mxu0 0.0
        %905 = vmatpush1.xpose.msra.mxu0 0.0
        %906 = vmatprep.subr.mxu0 0.0
        %907 = vmatpush1.xpose.msra.mxu0 0.0
        %908 = vmatprep.subr.mxu0 0.0
        %909 = vmatpush1.xpose.msra.mxu0 0.0
        %910 = vmatprep.subr.mxu0 0.0
        %911 = vmatpush1.xpose.msra.mxu0 0.0
        %912 = vmatprep.subr.mxu0 0.0
        %913 = vmatpush1.xpose.msra.mxu0 0.0
        %914 = vmatprep.subr.mxu0 0.0
        %915 = vmatpush1.xpose.msra.mxu0 0.0
        %916 = vmatprep.mubr.f32.mxu0 0.0
        %917 = vmatmul.mubr.f32.gmra.mrb[0].mxu0 %v432
        %v918 = vpop.f32.mrb[0].mxu0
        %v919 = vadd.f32 0.0, %v918
        %v920 = vpop.f32.mrb[0].mxu0
        %921 = vdwg.mxu0
        %v922 = vadd.f32 %v842, %v919
        %923 = vst.msk [vmem:[%s841] sm:$0xff] %vm511, %v922
        // Predicated region
        $region57: #{tpu_custom_call.1} parent=35 // pred_check
          %p924 = pneg %p415
        $region58: #{tpu_custom_call.1} parent=35 // pred_check_branch
          %926 = sbr.rel (%p924) target = $region60
        $region59: #{tpu_custom_call.1} parent=35 // pred_region
          %v927 = vld [vmem:[#allocation2] sm:$0xff]
          %v928 = vld [vmem:[#allocation2 + $0x8] sm:$0xff]
          %v929 = vmul.f32 %v927, 0.25
          %v930 = vmul.f32 %v928, 0.25
          %931 = vst.msk [vmem:[%s394] sm:$0xff] %vm511, %v929
          %932 = vst.msk [vmem:[%s394 + $0x8] sm:$0xff] %vm511, %v930
          %v933 = vld [vmem:[#allocation3] sm:$0xff]
          %v934 = vld [vmem:[#allocation3 + $0x8] sm:$0xff]
          %935 = vst.msk [vmem:[%s401] sm:$0xff] %vm511, %v933
          %936 = vst.msk [vmem:[%s401 + $0x8] sm:$0xff] %vm511, %v934
          %v937 = vld [vmem:[#allocation4] sm:$0xff]
          %v938 = vld [vmem:[#allocation4 + $0x8] sm:$0xff]
          %939 = vst.msk [vmem:[%s408] sm:$0xff] %vm511, %v937
          %940 = vst.msk [vmem:[%s408 + $0x8] sm:$0xff] %vm511, %v938
        $region60: #{tpu_custom_call.1} parent=35 // pred_fallthru
          _
        %s941 = sand.u32 %s181, 1
        %s942 = scalar_lea.sflag [#allocation7], %s941
        %s943 = sand.u32 %s181, 1
        %s944 = smul.addr %s943, 16
        %s945 = scalar_lea.vmem [#allocation13], %s944
        %s946 = sand.u32 %s29, 1
        %s947 = scalar_lea.sflag [#allocation15], %s946
        %s948 = sand.u32 %s211, 1
        %s949 = smul.addr %s948, 16
        %s950 = scalar_lea.vmem [#allocation14], %s949
        %s951 = sand.u32 %s29, 1
        %s952 = scalar_lea.sflag [#allocation15], %s951
        %s953 = sand.u32 %s241, 1
        %s954 = smul.addr %s953, 16
        %s955 = scalar_lea.vmem [#allocation16], %s954
        // Predicated region
        $region61: #{tpu_custom_call.1} parent=35 // pred_check
          %p956 = pneg %p191
        $region62: #{tpu_custom_call.1} parent=35 // pred_check_branch
          %958 = sbr.rel (%p956) target = $region64
        $region63: #{tpu_custom_call.1} parent=35 // pred_region
          %s959 = smul.u32 2, %s36
          %s961 = ssub.s32 256, 256
          %962 = vsyncadd %s942, %s961
          %s963 = sadd.s32 %s37, %s959
          %s964 = smul.addr %s35, 2
          %s965 = sadd.s32 %s963, %s964
          %s966 = smul.addr %s965, 128
          %s967 = scalar_lea.hbm %s4, %s966
          %s968 = sshll.u32 %s945, 4
          %s969 = int_to_ptr.vmem [resolvable:$true] %s968
          %974 = dma.vmem_to_hbm [thread:$0]  %s969, 256, %s967, %s942, 128, 128, 8
        $region64: #{tpu_custom_call.1} parent=35 // pred_fallthru
          _
        // Predicated region
        $region65: #{tpu_custom_call.1} parent=35 // pred_check
          %p975 = pneg %p221
        $region66: #{tpu_custom_call.1} parent=35 // pred_check_branch
          %977 = sbr.rel (%p975) target = $region68
        $region67: #{tpu_custom_call.1} parent=35 // pred_region
          %s978 = smul.u32 2, %s36
          %s980 = ssub.s32 256, 256
          %981 = vsyncadd %s947, %s980
          %s982 = sadd.s32 %s37, %s978
          %s983 = smul.addr %s35, 2
          %s984 = sadd.s32 %s982, %s983
          %s985 = smul.addr %s984, 128
          %s986 = scalar_lea.hbm %s5, %s985
          %s987 = sshll.u32 %s950, 4
          %s988 = int_to_ptr.vmem [resolvable:$true] %s987
          %993 = dma.vmem_to_hbm [thread:$0]  %s988, 256, %s986, %s947, 128, 128, 8
        $region68: #{tpu_custom_call.1} parent=35 // pred_fallthru
          _
        // Predicated region
        $region69: #{tpu_custom_call.1} parent=35 // pred_check
          %p994 = pneg %p251
        $region70: #{tpu_custom_call.1} parent=35 // pred_check_branch
          %996 = sbr.rel (%p994) target = $region72
        $region71: #{tpu_custom_call.1} parent=35 // pred_region
          %s997 = smul.u32 2, %s36
          %s999 = ssub.s32 256, 256
          %1000 = vsyncadd %s952, %s999
          %s1001 = sadd.s32 %s37, %s997
          %s1002 = smul.addr %s35, 2
          %s1003 = sadd.s32 %s1001, %s1002
          %s1004 = smul.addr %s1003, 128
          %s1005 = scalar_lea.hbm %s6, %s1004
          %s1006 = sshll.u32 %s955, 4
          %s1007 = int_to_ptr.vmem [resolvable:$true] %s1006
          %1012 = dma.vmem_to_hbm [thread:$0]  %s1007, 256, %s1005, %s952, 128, 128, 8
        $region72: #{tpu_custom_call.1} parent=35 // pred_fallthru
          _
      $region36: #{tpu_custom_call.1} parent=5 // pred_fallthru
        _
      %p1013 = scmp.le.s32.totalorder 2, %s24
      // Predicated region
      $region73: #{tpu_custom_call.1} parent=5 // pred_check
        %p1014 = pneg %p1013
      $region74: #{tpu_custom_call.1} parent=5 // pred_check_branch
        %1016 = sbr.rel (%p1014) target = $region76
      $region75: #{tpu_custom_call.1} parent=5 // pred_region
        %s1017 = ssub.s32 %s24, 2
        // Predicated region
        $region77: #{tpu_custom_call.1} parent=75 // pred_check
          %p1018 = pneg %p197
        $region78: #{tpu_custom_call.1} parent=75 // pred_check_branch
          %1020 = sbr.rel (%p1018) target = $region80
        $region79: #{tpu_custom_call.1} parent=75 // pred_region
          %s1021 = sand.u32 %s182, 1
          %s1022 = scalar_lea.sflag [#allocation7], %s1021
          %s1023 = sand.u32 %s182, 1
          %s1024 = smul.addr %s1023, 16
          %s1025 = scalar_lea.vmem [#allocation13], %s1024
          %1026 = dma.done %s1022, 256
        $region80: #{tpu_custom_call.1} parent=75 // pred_fallthru
          _
        // Predicated region
        $region81: #{tpu_custom_call.1} parent=75 // pred_check
          %p1027 = pneg %p227
        $region82: #{tpu_custom_call.1} parent=75 // pred_check_branch
          %1029 = sbr.rel (%p1027) target = $region84
        $region83: #{tpu_custom_call.1} parent=75 // pred_region
          %s1030 = sand.u32 %s30, 1
          %s1031 = scalar_lea.sflag [#allocation15], %s1030
          %s1032 = sand.u32 %s212, 1
          %s1033 = smul.addr %s1032, 16
          %s1034 = scalar_lea.vmem [#allocation14], %s1033
          %1035 = dma.done %s1031, 256
        $region84: #{tpu_custom_call.1} parent=75 // pred_fallthru
          _
        // Predicated region
        $region85: #{tpu_custom_call.1} parent=75 // pred_check
          %p1036 = pneg %p257
        $region86: #{tpu_custom_call.1} parent=75 // pred_check_branch
          %1038 = sbr.rel (%p1036) target = $region88
        $region87: #{tpu_custom_call.1} parent=75 // pred_region
          %s1039 = sand.u32 %s30, 1
          %s1040 = scalar_lea.sflag [#allocation15], %s1039
          %s1041 = sand.u32 %s242, 1
          %s1042 = smul.addr %s1041, 16
          %s1043 = scalar_lea.vmem [#allocation16], %s1042
          %1044 = dma.done %s1040, 256
        $region88: #{tpu_custom_call.1} parent=75 // pred_fallthru
          _
      $region76: #{tpu_custom_call.1} parent=5 // pred_fallthru
        _
    $region6: #{tpu_custom_call.1} parent=1 // loop_footer
      %s28 = sadd.s32 1, %s24
    $region7: #{tpu_custom_call.1} parent=1 // loop_footer_branch
      %23 = sbr.rel target = $region3
    $region8: #{tpu_custom_call.1} parent=1 // loop_exit
      _
    %1045 = vsyncpa [#allocation6], 1
    %s1046 = scalar_lea.sflag [#allocation6], 1
    %1047 = vsyncpa %s1046, 1
    %1048 = vsyncpa [#allocation9], 1
    %1049 = vsyncpa [#allocation12], 1
    %1050 = vsyncpa [#allocation7], 1
    %s1051 = scalar_lea.sflag [#allocation7], 1
    %1052 = vsyncpa %s1051, 1
    %1053 = vsyncpa [#allocation15], 1
    %s1054 = scalar_lea.sflag [#allocation15], 1
    %1055 = vsyncpa %s1054, 1

</llo_original>
